<compile_context>
chip_gen: v6e
topology: v6e:2x2x1
jax: 0.10.0
libtpu: 0.0.40
codegen_flags: <defaults>
</compile_context>

<pallas_src>
import jax
import jax.numpy as jnp
import numpy as np
from jax import lax
from jax.experimental import pallas as pl
from jax.experimental.pallas import tpu as pltpu


def _round_up(x, m):
    return (x + m - 1) // m * m


def deconv_stats_kernel(x_ref, w_ref, y_ref, stats_ref):
    """ConvTranspose2d(k=4,s=2,p=1) in sub-pixel phase layout + per-sample BN partials.

    x_ref:     (1, H+1, W+1, Kp)  bf16, tap-packed (Kp = round_up(4*Cin, 128), zero padded)
    w_ref:     (4, Kp, Cout_p)    bf16, per-phase weight slabs (tap-packed along K)
    y_ref:     (1, 4, H*W, Cout_p) bf16, y_ref[0, 2*dy+dx, qy*W+qx, co] == deconv[2*qy+dy, 2*qx+dx, co]
    stats_ref: (1, 2, Cout_p)     f32, [per-channel sum; per-channel sum of squares] (f32 acc)
    """
    Hp1, Wp1, Kp = x_ref.shape[1], x_ref.shape[2], x_ref.shape[3]
    H, W = Hp1 - 1, Wp1 - 1

    xc = x_ref[0]                                    # (H+1, W+1, Kp) bf16, tap-packed
    s_tot = jnp.zeros((1, w_ref.shape[2]), jnp.float32)
    sq_tot = jnp.zeros((1, w_ref.shape[2]), jnp.float32)

    for dy in range(2):
        for dx in range(2):
            p = 2 * dy + dx
            # One shifted window slice per phase (all 4 taps already packed along channels).
            win = xc[dy:dy + H, dx:dx + W, :].reshape(H * W, Kp)
            # One MXU matmul per phase, f32 accumulation. (No bias: it cancels through BN.)
            acc = jnp.dot(win, w_ref[p], preferred_element_type=jnp.float32)
            y_ref[0, p] = acc.astype(y_ref.dtype)    # bf16 intermediate: halves HBM traffic
            s_tot = s_tot + jnp.sum(acc, axis=0, keepdims=True)
            sq_tot = sq_tot + jnp.sum(acc * acc, axis=0, keepdims=True)

    stats_ref[0] = jnp.concatenate([s_tot, sq_tot], axis=0)      # (2, Cout_p)


def upsample2x_block(x_nchw, w_pt, bias, gamma, beta, eps=1e-5):
    # NOTE: `bias` is intentionally unused. A per-channel constant added before training-mode
    # BatchNorm cancels exactly (it shifts the batch mean and leaves the variance unchanged),
    # so dropping it is bit-equivalent modulo rounding and saves a full VPU pass + DMA.
    del bias
    N, Cin, H, W = x_nchw.shape
    Cout = w_pt.shape[1]
    Kp = _round_up(4 * Cin, 128)          # tap-packed K, padded AFTER packing (128 vs 4*128)
    Cout_p = _round_up(Cout, 128)

    # --- glue: tap-packed, lane-dense input (one XLA fusion: pad + 4 shifts + concat + cast) ---
    x = jnp.transpose(x_nchw, (0, 2, 3, 1))                               # NHWC
    xpad = jnp.pad(x, ((0, 0), (1, 1), (1, 1), (0, 0)))                   # (N, H+2, W+2, Cin)
    taps = [xpad[:, ta:ta + H + 1, tb:tb + W + 1, :]
            for ta in range(2) for tb in range(2)]                        # tap order (0,0),(0,1),(1,0),(1,1)
    xcat4 = jnp.concatenate(taps, axis=-1)                                # (N, H+1, W+1, 4*Cin)
    xcat4 = jnp.pad(xcat4, ((0, 0), (0, 0), (0, 0), (0, Kp - 4 * Cin))).astype(jnp.bfloat16)

    # --- glue: per-phase tap-packed weight slabs (pad AFTER packing) ---
    w_k = jnp.transpose(w_pt, (2, 3, 0, 1))                               # (kH, kW, Cin, Cout)
    slabs = []
    for dy in range(2):
        for dx in range(2):
            parts = [w_k[3 - dy - 2 * ta, 3 - dx - 2 * tb]
                     for ta in range(2) for tb in range(2)]               # 4 x (Cin, Cout)
            slabs.append(jnp.concatenate(parts, axis=0))                  # (4*Cin, Cout)
    w_cat = jnp.stack(slabs, axis=0)                                      # (4, 4*Cin, Cout)
    w_cat = jnp.pad(w_cat, ((0, 0), (0, Kp - 4 * Cin), (0, Cout_p - Cout))).astype(jnp.bfloat16)

    y_phase, stats = pl.pallas_call(
        deconv_stats_kernel,
        out_shape=(jax.ShapeDtypeStruct((N, 4, H * W, Cout_p), jnp.bfloat16),
                   jax.ShapeDtypeStruct((N, 2, Cout_p), jnp.float32)),
        grid_spec=pltpu.PrefetchScalarGridSpec(
            num_scalar_prefetch=0,
            grid=(N,),
            in_specs=[
                pl.BlockSpec((1, H + 1, W + 1, Kp), lambda n: (n, 0, 0, 0)),
                pl.BlockSpec((4, Kp, Cout_p), lambda n: (0, 0, 0)),
            ],
            out_specs=[
                pl.BlockSpec((1, 4, H * W, Cout_p), lambda n: (n, 0, 0, 0)),
                pl.BlockSpec((1, 2, Cout_p), lambda n: (n, 0, 0)),         # per-sample partials
            ],
        ),
        compiler_params=pltpu.CompilerParams(
            dimension_semantics=("parallel",),
            vmem_limit_bytes=32 * 1024 * 1024,     # explicit; raises the v5e 16 MiB scoped default
        ),
    )(xcat4, w_cat)

    # --- glue: fold batch statistics into per-channel scale/shift (tiny XLA reduce, f32) ---
    # NOTE: E[y^2]-E[y]^2 in f32 can cancel for huge N*H*W; fine at these sizes (no bias helps).
    count = float(N * (2 * H) * (2 * W))
    tot = jnp.sum(stats, axis=0)                         # (2, Cout_p)
    mean = tot[0] / count
    var = tot[1] / count - mean * mean                   # biased variance (PyTorch BN training)
    inv_std = lax.rsqrt(var + eps)                       # padded channels: var=0 -> rsqrt(eps),
    gamma_p = jnp.pad(gamma, (0, Cout_p - Cout)).astype(jnp.float32)   # harmless, sliced off below
    beta_p = jnp.pad(beta, (0, Cout_p - Cout)).astype(jnp.float32)
    scale = gamma_p * inv_std
    shift = beta_p - mean * gamma_p * inv_std
    # TODO(synk): BatchNorm2d running_mean/running_var buffer updates are stateful side effects
    # and are not reproduced (they do not affect this forward output).

    # --- glue: single fused epilogue (BN affine + ReLU + channel un-pad + phase de-interleave
    #           + NHWC->NCHW). The elementwise work rides along with the transpose copy. ---
    out_phase = jnp.maximum(y_phase.astype(jnp.float32) * scale + shift, 0.0)
    out = out_phase.reshape(N, 2, 2, H, W, Cout_p)[..., :Cout]   # (n, dy, dx, qy, qx, c)
    out = jnp.transpose(out, (0, 5, 3, 1, 4, 2))                 # (n, c, qy, dy, qx, dx)
    return out.reshape(N, Cout, 2 * H, 2 * W)


def reference(x, w_pt, bias, gamma, beta, eps=1e-5):
    """Pure-JAX f32 reference matching the PyTorch forward (bias included)."""
    w_conv = jnp.flip(jnp.transpose(w_pt, (1, 0, 2, 3)), axis=(2, 3))  # OIHW, flipped
    y = lax.conv_general_dilated(
        x, w_conv, window_strides=(1, 1), padding=((2, 2), (2, 2)),
        lhs_dilation=(2, 2), rhs_dilation=(1, 1),
        dimension_numbers=("NCHW", "OIHW", "NCHW"))
    y = y + bias[None, :, None, None]
    mean = y.mean(axis=(0, 2, 3), keepdims=True)
    var = y.var(axis=(0, 2, 3), keepdims=True)
    yn = (y - mean) / jnp.sqrt(var + eps)
    yn = yn * gamma[None, :, None, None] + beta[None, :, None, None]
    return jnp.maximum(yn, 0.0)


if __name__ == "__main__":
    key = jax.random.PRNGKey(0)
    k1, k2, k3, k4, k5 = jax.random.split(key, 5)

    N, Cin, Cout, H, W = 2, 4, 4, 16, 16
    x = jax.random.normal(k1, (N, Cin, H, W), jnp.float32)
    # ConvTranspose2d weight shape: (in_channels, out_channels, kH, kW)
    w_pt = 0.1 * jax.random.normal(k2, (Cin, Cout, 4, 4), jnp.float32)
    bias = 0.1 * jax.random.normal(k3, (Cout,), jnp.float32)
    gamma = 1.0 + 0.1 * jax.random.normal(k4, (Cout,), jnp.float32)
    beta = 0.1 * jax.random.normal(k5, (Cout,), jnp.float32)

    out = jax.jit(upsample2x_block)(x, w_pt, bias, gamma, beta)
    out = jax.block_until_ready(out)

    ref = reference(x, w_pt, bias, gamma, beta)
    # bf16 MXU operands + bf16 intermediate vs f32 reference -> ~1e-2 worst case after BN.
    np.testing.assert_allclose(np.asarray(out), np.asarray(ref), rtol=2e-2, atol=2e-2)
    print("KERNEL_OK")
</pallas_src>

<mosaic_0001>
module attributes {stable_mosaic.version = 11 : i64} {
  func.func @deconv_stats_kernel(%arg0: i32, %arg1: memref<1x17x17x128xbf16, #tpu.memory_space<vmem>>, %arg2: memref<4x128x128xbf16, #tpu.memory_space<vmem>>, %arg3: memref<1x4x256x128xbf16, #tpu.memory_space<vmem>>, %arg4: memref<1x2x128xf32, #tpu.memory_space<vmem>>) attributes {dimension_semantics = [#tpu.dimension_semantics<parallel>], iteration_bounds = array<i64: 2>, scalar_prefetch = 0 : i64, scratch_operands = 0 : i64, tpu.core_type = #tpu.core_type<tc>, window_params = [{transform_indices = @transform_0, window_bounds = array<i64: 1, 17, 17, 128>}, {pipeline_mode = #tpu.pipeline_mode<synchronous>, transform_indices = @transform_1, window_bounds = array<i64: 4, 128, 128>}, {transform_indices = @transform_2, window_bounds = array<i64: 1, 4, 256, 128>}, {transform_indices = @transform_3, window_bounds = array<i64: 1, 2, 128>}]} {
    %c0 = arith.constant 0 : index
    %c0_0 = arith.constant 0 : index
    %c0_1 = arith.constant 0 : index
    %c0_2 = arith.constant 0 : index
    %0 = vector.load %arg1[%c0, %c0_0, %c0_1, %c0_2] : memref<1x17x17x128xbf16, #tpu.memory_space<vmem>>, vector<1x17x17x128xbf16>
    %1 = vector.shape_cast %0 : vector<1x17x17x128xbf16> to vector<17x17x128xbf16>
    %cst = arith.constant 0.000000e+00 : f32
    %2 = vector.broadcast %cst : f32 to vector<1x128xf32>
    %cst_3 = arith.constant 0.000000e+00 : f32
    %3 = vector.broadcast %cst_3 : f32 to vector<1x128xf32>
    %4 = vector.extract_strided_slice %1 {offsets = [0, 0, 0], sizes = [16, 16, 128], strides = [1, 1, 1]} : vector<17x17x128xbf16> to vector<16x16x128xbf16>
    %5 = vector.shape_cast %4 : vector<16x16x128xbf16> to vector<256x128xbf16>
    %c0_4 = arith.constant 0 : index
    %c0_5 = arith.constant 0 : index
    %c0_6 = arith.constant 0 : index
    %6 = vector.load %arg2[%c0_4, %c0_5, %c0_6] : memref<4x128x128xbf16, #tpu.memory_space<vmem>>, vector<1x128x128xbf16>
    %7 = vector.shape_cast %6 : vector<1x128x128xbf16> to vector<128x128xbf16>
    %cst_7 = arith.constant dense<0.000000e+00> : vector<256x128xf32>
    %8 = tpu.matmul %5, %7, %cst_7 {dimension_numbers = #tpu.dot_dimension_numbers<[1], [0], [0], [1], [0, 0, 1, 1], [], []>} : vector<256x128xbf16>, vector<128x128xbf16>, vector<256x128xf32> -> vector<256x128xf32>
    %9 = arith.truncf %8 : vector<256x128xf32> to vector<256x128xbf16>
    %c0_8 = arith.constant 0 : index
    %c0_9 = arith.constant 0 : index
    %c0_10 = arith.constant 0 : index
    %c0_11 = arith.constant 0 : index
    %10 = vector.load %arg3[%c0_8, %c0_9, %c0_10, %c0_11] : memref<1x4x256x128xbf16, #tpu.memory_space<vmem>>, vector<1x1x256x128xbf16>
    %11 = vector.shape_cast %10 : vector<1x1x256x128xbf16> to vector<256x128xbf16>
    %12 = vector.shape_cast %9 : vector<256x128xbf16> to vector<1x1x256x128xbf16>
    tpu.vector_store %arg3[%c0_8, %c0_9, %c0_10, %c0_11], %12 {strides = array<i32>} : memref<1x4x256x128xbf16, #tpu.memory_space<vmem>>, vector<1x1x256x128xbf16>,
    %cst_12 = arith.constant dense<0.000000e+00> : vector<128xf32>
    %13 = vector.multi_reduction <add>, %8, %cst_12 [0] : vector<256x128xf32> to vector<128xf32>
    %14 = vector.shape_cast %13 : vector<128xf32> to vector<1x128xf32>
    %15 = arith.addf %2, %14 : vector<1x128xf32>
    %16 = arith.mulf %8, %8 : vector<256x128xf32>
    %cst_13 = arith.constant dense<0.000000e+00> : vector<128xf32>
    %17 = vector.multi_reduction <add>, %16, %cst_13 [0] : vector<256x128xf32> to vector<128xf32>
    %18 = vector.shape_cast %17 : vector<128xf32> to vector<1x128xf32>
    %19 = arith.addf %3, %18 : vector<1x128xf32>
    %20 = vector.extract_strided_slice %1 {offsets = [0, 1, 0], sizes = [16, 16, 128], strides = [1, 1, 1]} : vector<17x17x128xbf16> to vector<16x16x128xbf16>
    %21 = vector.shape_cast %20 : vector<16x16x128xbf16> to vector<256x128xbf16>
    %c1 = arith.constant 1 : index
    %c0_14 = arith.constant 0 : index
    %c0_15 = arith.constant 0 : index
    %22 = vector.load %arg2[%c1, %c0_14, %c0_15] : memref<4x128x128xbf16, #tpu.memory_space<vmem>>, vector<1x128x128xbf16>
    %23 = vector.shape_cast %22 : vector<1x128x128xbf16> to vector<128x128xbf16>
    %cst_16 = arith.constant dense<0.000000e+00> : vector<256x128xf32>
    %24 = tpu.matmul %21, %23, %cst_16 {dimension_numbers = #tpu.dot_dimension_numbers<[1], [0], [0], [1], [0, 0, 1, 1], [], []>} : vector<256x128xbf16>, vector<128x128xbf16>, vector<256x128xf32> -> vector<256x128xf32>
    %25 = arith.truncf %24 : vector<256x128xf32> to vector<256x128xbf16>
    %c0_17 = arith.constant 0 : index
    %c1_18 = arith.constant 1 : index
    %c0_19 = arith.constant 0 : index
    %c0_20 = arith.constant 0 : index
    %26 = vector.load %arg3[%c0_17, %c1_18, %c0_19, %c0_20] : memref<1x4x256x128xbf16, #tpu.memory_space<vmem>>, vector<1x1x256x128xbf16>
    %27 = vector.shape_cast %26 : vector<1x1x256x128xbf16> to vector<256x128xbf16>
    %28 = vector.shape_cast %25 : vector<256x128xbf16> to vector<1x1x256x128xbf16>
    tpu.vector_store %arg3[%c0_17, %c1_18, %c0_19, %c0_20], %28 {strides = array<i32>} : memref<1x4x256x128xbf16, #tpu.memory_space<vmem>>, vector<1x1x256x128xbf16>,
    %cst_21 = arith.constant dense<0.000000e+00> : vector<128xf32>
    %29 = vector.multi_reduction <add>, %24, %cst_21 [0] : vector<256x128xf32> to vector<128xf32>
    %30 = vector.shape_cast %29 : vector<128xf32> to vector<1x128xf32>
    %31 = arith.addf %15, %30 : vector<1x128xf32>
    %32 = arith.mulf %24, %24 : vector<256x128xf32>
    %cst_22 = arith.constant dense<0.000000e+00> : vector<128xf32>
    %33 = vector.multi_reduction <add>, %32, %cst_22 [0] : vector<256x128xf32> to vector<128xf32>
    %34 = vector.shape_cast %33 : vector<128xf32> to vector<1x128xf32>
    %35 = arith.addf %19, %34 : vector<1x128xf32>
    %36 = vector.extract_strided_slice %1 {offsets = [1, 0, 0], sizes = [16, 16, 128], strides = [1, 1, 1]} : vector<17x17x128xbf16> to vector<16x16x128xbf16>
    %37 = vector.shape_cast %36 : vector<16x16x128xbf16> to vector<256x128xbf16>
    %c2 = arith.constant 2 : index
    %c0_23 = arith.constant 0 : index
    %c0_24 = arith.constant 0 : index
    %38 = vector.load %arg2[%c2, %c0_23, %c0_24] : memref<4x128x128xbf16, #tpu.memory_space<vmem>>, vector<1x128x128xbf16>
    %39 = vector.shape_cast %38 : vector<1x128x128xbf16> to vector<128x128xbf16>
    %cst_25 = arith.constant dense<0.000000e+00> : vector<256x128xf32>
    %40 = tpu.matmul %37, %39, %cst_25 {dimension_numbers = #tpu.dot_dimension_numbers<[1], [0], [0], [1], [0, 0, 1, 1], [], []>} : vector<256x128xbf16>, vector<128x128xbf16>, vector<256x128xf32> -> vector<256x128xf32>
    %41 = arith.truncf %40 : vector<256x128xf32> to vector<256x128xbf16>
    %c0_26 = arith.constant 0 : index
    %c2_27 = arith.constant 2 : index
    %c0_28 = arith.constant 0 : index
    %c0_29 = arith.constant 0 : index
    %42 = vector.load %arg3[%c0_26, %c2_27, %c0_28, %c0_29] : memref<1x4x256x128xbf16, #tpu.memory_space<vmem>>, vector<1x1x256x128xbf16>
    %43 = vector.shape_cast %42 : vector<1x1x256x128xbf16> to vector<256x128xbf16>
    %44 = vector.shape_cast %41 : vector<256x128xbf16> to vector<1x1x256x128xbf16>
    tpu.vector_store %arg3[%c0_26, %c2_27, %c0_28, %c0_29], %44 {strides = array<i32>} : memref<1x4x256x128xbf16, #tpu.memory_space<vmem>>, vector<1x1x256x128xbf16>,
    %cst_30 = arith.constant dense<0.000000e+00> : vector<128xf32>
    %45 = vector.multi_reduction <add>, %40, %cst_30 [0] : vector<256x128xf32> to vector<128xf32>
    %46 = vector.shape_cast %45 : vector<128xf32> to vector<1x128xf32>
    %47 = arith.addf %31, %46 : vector<1x128xf32>
    %48 = arith.mulf %40, %40 : vector<256x128xf32>
    %cst_31 = arith.constant dense<0.000000e+00> : vector<128xf32>
    %49 = vector.multi_reduction <add>, %48, %cst_31 [0] : vector<256x128xf32> to vector<128xf32>
    %50 = vector.shape_cast %49 : vector<128xf32> to vector<1x128xf32>
    %51 = arith.addf %35, %50 : vector<1x128xf32>
    %52 = vector.extract_strided_slice %1 {offsets = [1, 1, 0], sizes = [16, 16, 128], strides = [1, 1, 1]} : vector<17x17x128xbf16> to vector<16x16x128xbf16>
    %53 = vector.shape_cast %52 : vector<16x16x128xbf16> to vector<256x128xbf16>
    %c3 = arith.constant 3 : index
    %c0_32 = arith.constant 0 : index
    %c0_33 = arith.constant 0 : index
    %54 = vector.load %arg2[%c3, %c0_32, %c0_33] : memref<4x128x128xbf16, #tpu.memory_space<vmem>>, vector<1x128x128xbf16>
    %55 = vector.shape_cast %54 : vector<1x128x128xbf16> to vector<128x128xbf16>
    %cst_34 = arith.constant dense<0.000000e+00> : vector<256x128xf32>
    %56 = tpu.matmul %53, %55, %cst_34 {dimension_numbers = #tpu.dot_dimension_numbers<[1], [0], [0], [1], [0, 0, 1, 1], [], []>} : vector<256x128xbf16>, vector<128x128xbf16>, vector<256x128xf32> -> vector<256x128xf32>
    %57 = arith.truncf %56 : vector<256x128xf32> to vector<256x128xbf16>
    %c0_35 = arith.constant 0 : index
    %c3_36 = arith.constant 3 : index
    %c0_37 = arith.constant 0 : index
    %c0_38 = arith.constant 0 : index
    %58 = vector.load %arg3[%c0_35, %c3_36, %c0_37, %c0_38] : memref<1x4x256x128xbf16, #tpu.memory_space<vmem>>, vector<1x1x256x128xbf16>
    %59 = vector.shape_cast %58 : vector<1x1x256x128xbf16> to vector<256x128xbf16>
    %60 = vector.shape_cast %57 : vector<256x128xbf16> to vector<1x1x256x128xbf16>
    tpu.vector_store %arg3[%c0_35, %c3_36, %c0_37, %c0_38], %60 {strides = array<i32>} : memref<1x4x256x128xbf16, #tpu.memory_space<vmem>>, vector<1x1x256x128xbf16>,
    %cst_39 = arith.constant dense<0.000000e+00> : vector<128xf32>
    %61 = vector.multi_reduction <add>, %56, %cst_39 [0] : vector<256x128xf32> to vector<128xf32>
    %62 = vector.shape_cast %61 : vector<128xf32> to vector<1x128xf32>
    %63 = arith.addf %47, %62 : vector<1x128xf32>
    %64 = arith.mulf %56, %56 : vector<256x128xf32>
    %cst_40 = arith.constant dense<0.000000e+00> : vector<128xf32>
    %65 = vector.multi_reduction <add>, %64, %cst_40 [0] : vector<256x128xf32> to vector<128xf32>
    %66 = vector.shape_cast %65 : vector<128xf32> to vector<1x128xf32>
    %67 = arith.addf %51, %66 : vector<1x128xf32>
    %68 = tpu.concatenate %63, %67 in 0 : vector<1x128xf32>, vector<1x128xf32> -> vector<2x128xf32>
    %c0_41 = arith.constant 0 : index
    %c0_42 = arith.constant 0 : index
    %c0_43 = arith.constant 0 : index
    %69 = vector.load %arg4[%c0_41, %c0_42, %c0_43] : memref<1x2x128xf32, #tpu.memory_space<vmem>>, vector<1x2x128xf32>
    %70 = vector.shape_cast %69 : vector<1x2x128xf32> to vector<2x128xf32>
    %71 = vector.shape_cast %68 : vector<2x128xf32> to vector<1x2x128xf32>
    tpu.vector_store %arg4[%c0_41, %c0_42, %c0_43], %71 {strides = array<i32>} : memref<1x2x128xf32, #tpu.memory_space<vmem>>, vector<1x2x128xf32>,
    return
  }
  func.func @transform_0(%arg0: i32) -> (i32, i32, i32, i32) {
    %c0_i32 = arith.constant 0 : i32
    %c0_i32_0 = arith.constant 0 : i32
    %c0_i32_1 = arith.constant 0 : i32
    %c0_i32_2 = arith.constant 0 : i32
    return %arg0, %c0_i32, %c0_i32_0, %c0_i32_1 : i32, i32, i32, i32
  }
  func.func @transform_1(%arg0: i32) -> (i32, i32, i32) {
    %c0_i32 = arith.constant 0 : i32
    %c0_i32_0 = arith.constant 0 : i32
    %c0_i32_1 = arith.constant 0 : i32
    %c0_i32_2 = arith.constant 0 : i32
    return %c0_i32, %c0_i32_0, %c0_i32_1 : i32, i32, i32
  }
  func.func @transform_2(%arg0: i32) -> (i32, i32, i32, i32) {
    %c0_i32 = arith.constant 0 : i32
    %c0_i32_0 = arith.constant 0 : i32
    %c0_i32_1 = arith.constant 0 : i32
    %c0_i32_2 = arith.constant 0 : i32
    return %arg0, %c0_i32, %c0_i32_0, %c0_i32_1 : i32, i32, i32, i32
  }
  func.func @transform_3(%arg0: i32) -> (i32, i32, i32) {
    %c0_i32 = arith.constant 0 : i32
    %c0_i32_0 = arith.constant 0 : i32
    %c0_i32_1 = arith.constant 0 : i32
    return %arg0, %c0_i32, %c0_i32_0 : i32, i32, i32
  }
}

</mosaic_0001>

<llo_original>
// kernel: upsample2x_block.1
$region0: #{upsample2x_block.1}
  #allocation0 [shape = 'u32[]', space=smem, size = 0x4, offset = 0x4, fixed_abs, tag = 'smem constant byte address 0x4 - core index']
  #allocation1 [shape = 'u32[144,128]{1,0:T(1,128)}', space=vmem, size = 0x12000, scoped, tag = 'internal scratch']
  %s0 = inlined_call_operand.vmem [shape: bf16[2,17,17,128], index: 0, kind: input, shape index: {}]
  %s1 = inlined_call_operand.vmem [shape: bf16[4,128,128], index: 1, kind: input, shape index: {}]
  %s2 = inlined_call_operand.vmem [shape: bf16[2,4,256,128], index: 2, kind: output, shape index: {0}]
  %s3 = inlined_call_operand.vmem [shape: f32[2,2,128], index: 3, kind: output, shape index: {1}]
  %4 = xla_tuple %s2, %s3
  %s5 = sld [smem:[#allocation0]]
  $region49: #{upsample2x_block.1} parent=0
    _
  %s7 = ssub.s32 1, %s5
  %s8 = scalar_select 0, %s7, %s5
  loop: start=0, step=1, limit=4
  $region2: #{upsample2x_block.1} parent=0 // loop_pre_header
    _
  $region3: #{upsample2x_block.1} parent=0 // loop_header
    %s10 = sphi 0, %s14
    %p11 = scmp.ge.s32.totalorder %s10, 4
    %s20 = sphi 0, %s22
    %s23 = sphi 0, %s20
    %s24 = sphi 0, %s23
    %s40 = sphi 0, %s24
    %s44 = sphi 0, %s44
    %s46 = sphi 0, %s44
    %s47 = sphi 0, %s46
    %s61 = sphi 0, %s47
    %s67 = sphi 0, %s69
    %s70 = sphi 0, %s67
    %s71 = sphi 0, %s70
    %s87 = sphi 0, %s71
    %s93 = sphi 0, %s95
    %s96 = sphi 0, %s93
    %s97 = sphi 0, %s96
    %s113 = sphi 0, %s97
  $region4: #{upsample2x_block.1} parent=0 // loop_header_branch
    %13 = sbr.rel (%p11) target = $region8
  $region5: #{upsample2x_block.1} parent=0 // loop_body
    %s15 = ssub.s32 %s10, 1
    %s16 = ssub.s32 %s10, 2
    %s17 = sadd.s32 %s10, 1
    %s18 = ssub.s32 %s10, %s17
    %p19 = scmp.eq.s32.totalorder %s18, 0
    %s21 = sadd.s32 %s20, 1
    %s22 = scalar_select %p19, %s20, %s21
    %p25 = pneg %p19
    %p26 = scmp.eq.s32.totalorder %s10, 1
    %p27 = por %p25, %p26
    %p28 = scmp.ne.s32.totalorder %s20, %s23
    %p29 = scmp.eq.s32.totalorder %s10, 0
    %p30 = por %p28, %p29
    %p31 = scmp.ne.s32.totalorder %s20, %s23
    %p32 = scmp.eq.s32.totalorder %s15, 1
    %p33 = por %p31, %p32
    %p34 = scmp.ne.s32.totalorder %s23, %s24
    %p35 = scmp.eq.s32.totalorder %s15, 0
    %p36 = por %p34, %p35
    %p37 = scmp.ne.s32.totalorder %s23, %s24
    %p38 = scmp.eq.s32.totalorder %s16, 1
    %p39 = por %p37, %p38
    %p41 = scmp.ne.s32.totalorder %s24, %s40
    %p42 = scmp.eq.s32.totalorder %s16, 0
    %p43 = por %p41, %p42
    %s45 = sadd.s32 %s44, 1
    %p48 = scmp.eq.s32.totalorder %s10, 1
    %p49 = scmp.ne.s32.totalorder %s44, %s46
    %p50 = scmp.eq.s32.totalorder %s10, 0
    %p51 = por %p49, %p50
    %p52 = scmp.ne.s32.totalorder %s44, %s46
    %p53 = scmp.eq.s32.totalorder %s15, 1
    %p54 = por %p52, %p53
    %p55 = scmp.ne.s32.totalorder %s46, %s47
    %p56 = scmp.eq.s32.totalorder %s15, 0
    %p57 = por %p55, %p56
    %p58 = scmp.ne.s32.totalorder %s46, %s47
    %p59 = scmp.eq.s32.totalorder %s16, 1
    %p60 = por %p58, %p59
    %p62 = scmp.ne.s32.totalorder %s47, %s61
    %p63 = scmp.eq.s32.totalorder %s16, 0
    %p64 = por %p62, %p63
    %s65 = ssub.s32 %s10, %s17
    %p66 = scmp.eq.s32.totalorder %s65, 0
    %s68 = sadd.s32 %s67, 1
    %s69 = scalar_select %p66, %s67, %s68
    %p72 = pneg %p66
    %p73 = scmp.eq.s32.totalorder %s10, 1
    %p74 = por %p72, %p73
    %p75 = scmp.ne.s32.totalorder %s67, %s70
    %p76 = scmp.eq.s32.totalorder %s10, 0
    %p77 = por %p75, %p76
    %p78 = scmp.ne.s32.totalorder %s67, %s70
    %p79 = scmp.eq.s32.totalorder %s15, 1
    %p80 = por %p78, %p79
    %p81 = scmp.ne.s32.totalorder %s70, %s71
    %p82 = scmp.eq.s32.totalorder %s15, 0
    %p83 = por %p81, %p82
    %p84 = scmp.ne.s32.totalorder %s70, %s71
    %p85 = scmp.eq.s32.totalorder %s16, 1
    %p86 = por %p84, %p85
    %p88 = scmp.ne.s32.totalorder %s71, %s87
    %p89 = scmp.eq.s32.totalorder %s16, 0
    %p90 = por %p88, %p89
    %s91 = ssub.s32 %s10, %s17
    %p92 = scmp.eq.s32.totalorder %s91, 0
    %s94 = sadd.s32 %s93, 1
    %s95 = scalar_select %p92, %s93, %s94
    %p98 = pneg %p92
    %p99 = scmp.eq.s32.totalorder %s10, 1
    %p100 = por %p98, %p99
    %p101 = scmp.ne.s32.totalorder %s93, %s96
    %p102 = scmp.eq.s32.totalorder %s10, 0
    %p103 = por %p101, %p102
    %p104 = scmp.ne.s32.totalorder %s93, %s96
    %p105 = scmp.eq.s32.totalorder %s15, 1
    %p106 = por %p104, %p105
    %p107 = scmp.ne.s32.totalorder %s96, %s97
    %p108 = scmp.eq.s32.totalorder %s15, 0
    %p109 = por %p107, %p108
    %p110 = scmp.ne.s32.totalorder %s96, %s97
    %p111 = scmp.eq.s32.totalorder %s16, 1
    %p112 = por %p110, %p111
    %p114 = scmp.ne.s32.totalorder %s97, %s113
    %p115 = scmp.eq.s32.totalorder %s16, 0
    %p116 = por %p114, %p115
    %p117 = scmp.le.s32.totalorder 1, %s10
    %p118 = scmp.lt.s32.totalorder %s10, 3
    %p119 = pnand %p117, %p118
    %p120 = pneg %p119
    // Predicated region
    $region9: #{upsample2x_block.1} parent=5 // pred_check
      _
    $region10: #{upsample2x_block.1} parent=5 // pred_check_branch
      %122 = sbr.rel (%p119) target = $region12
    $region11: #{upsample2x_block.1} parent=5 // pred_region
      %s123 = ssub.s32 %s10, 1
      // Predicated region
      $region13: #{upsample2x_block.1} parent=11 // pred_check
        %p124 = pneg %p57
      $region14: #{upsample2x_block.1} parent=11 // pred_check_branch
        %126 = sbr.rel (%p124) target = $region16
      $region15: #{upsample2x_block.1} parent=11 // pred_region
        _
      $region16: #{upsample2x_block.1} parent=11 // pred_fallthru
        _
    $region12: #{upsample2x_block.1} parent=5 // pred_fallthru
      _
    %p127 = scmp.lt.s32.totalorder %s10, 2
    // Predicated region
    $region17: #{upsample2x_block.1} parent=5 // pred_check
      %p128 = pneg %p127
    $region18: #{upsample2x_block.1} parent=5 // pred_check_branch
      %130 = sbr.rel (%p128) target = $region20
    $region19: #{upsample2x_block.1} parent=5 // pred_region
      // Predicated region
      $region21: #{upsample2x_block.1} parent=19 // pred_check
        %p131 = pneg %p30
      $region22: #{upsample2x_block.1} parent=19 // pred_check_branch
        %133 = sbr.rel (%p131) target = $region24
      $region23: #{upsample2x_block.1} parent=19 // pred_region
        %p134 = scmp.lt.s32.totalorder %s10, 1
        %s135 = scalar_select %p134, %s10, 1
        %s136 = smul.addr %s135, 51
        %s137 = smul.addr %s136, 4
        %s138 = scalar_lea.vmem %s0, %s137
      $region24: #{upsample2x_block.1} parent=19 // pred_fallthru
        _
    $region20: #{upsample2x_block.1} parent=5 // pred_fallthru
      _
    %p139 = scmp.le.s32.totalorder 1, %s10
    %p140 = scmp.lt.s32.totalorder %s10, 3
    %p141 = pnand %p139, %p140
    %p142 = pneg %p141
    // Predicated region
    $region25: #{upsample2x_block.1} parent=5 // pred_check
      _
    $region26: #{upsample2x_block.1} parent=5 // pred_check_branch
      %144 = sbr.rel (%p141) target = $region28
    $region27: #{upsample2x_block.1} parent=5 // pred_region
      %s145 = ssub.s32 %s10, 1
      %p146 = scmp.lt.s32.totalorder %s15, 1
      %s147 = scalar_select %p146, %s15, 1
      %s148 = smul.addr %s147, 51
      %s149 = smul.addr %s148, 4
      %s150 = scalar_lea.vmem %s0, %s149
      %p151 = pneg %p36
      %p152 = pneg %p33
      %p153 = pneg %p57
      %p154 = pneg %p54
      %p155 = pneg %p83
      %p156 = pneg %p80
      %p157 = scmp.lt.s32.totalorder %s15, 1
      %s158 = scalar_select %p157, %s15, 1
      %s159 = smul.addr %s158, 128
      %s160 = smul.addr %s159, 4
      %s161 = scalar_lea.vmem %s2, %s160
      %p162 = pneg %p109
      %p163 = pneg %p106
      %p164 = scmp.lt.s32.totalorder %s15, 1
      %s165 = scalar_select %p164, %s15, 1
      %s166 = smul.addr %s165, 2
      %s167 = scalar_lea.vmem %s3, %s166
      %p168 = scmp.lt.s32.totalorder %s15, 1
      %s169 = scalar_select %p168, %s15, 1
      %s170 = smul.addr %s169, 51
      %s171 = smul.addr %s170, 4
      %s172 = scalar_lea.vmem %s0, %s171
      %p173 = scmp.lt.s32.totalorder %s15, 1
      %s174 = scalar_select %p173, %s15, 1
      %s175 = smul.addr %s174, 128
      %s176 = smul.addr %s175, 4
      %s177 = scalar_lea.vmem %s2, %s176
      %p178 = scmp.lt.s32.totalorder %s15, 1
      %s179 = scalar_select %p178, %s15, 1
      %s180 = smul.addr %s179, 2
      %s181 = scalar_lea.vmem %s3, %s180
      %v183 = vld [vmem:[%s172] sm:$0xf]
      %v184 = vld [vmem:[%s172 + $0x4] sm:$0xf]
      %v185 = vld [vmem:[%s172 + $0x8] sm:$0x1]
      %v186 = vld [vmem:[%s172 + $0xc] sm:$0xf]
      %v187 = vld [vmem:[%s172 + $0x10] sm:$0xf]
      %v188 = vld [vmem:[%s172 + $0x14] sm:$0x1]
      %v189 = vld [vmem:[%s172 + $0x18] sm:$0xf]
      %v190 = vld [vmem:[%s172 + $0x1c] sm:$0xf]
      %v191 = vld [vmem:[%s172 + $0x20] sm:$0x1]
      %v192 = vld [vmem:[%s172 + $0x24] sm:$0xf]
      %v193 = vld [vmem:[%s172 + $0x28] sm:$0xf]
      %v194 = vld [vmem:[%s172 + $0x2c] sm:$0x1]
      %v195 = vld [vmem:[%s172 + $0x30] sm:$0xf]
      %v196 = vld [vmem:[%s172 + $0x34] sm:$0xf]
      %v197 = vld [vmem:[%s172 + $0x38] sm:$0x1]
      %v198 = vld [vmem:[%s172 + $0x3c] sm:$0xf]
      %v199 = vld [vmem:[%s172 + $0x40] sm:$0xf]
      %v200 = vld [vmem:[%s172 + $0x44] sm:$0x1]
      %v201 = vld [vmem:[%s172 + $0x48] sm:$0xf]
      %v202 = vld [vmem:[%s172 + $0x4c] sm:$0xf]
      %v203 = vld [vmem:[%s172 + $0x50] sm:$0x1]
      %v204 = vld [vmem:[%s172 + $0x54] sm:$0xf]
      %v205 = vld [vmem:[%s172 + $0x58] sm:$0xf]
      %v206 = vld [vmem:[%s172 + $0x5c] sm:$0x1]
      %v207 = vld [vmem:[%s172 + $0x60] sm:$0xf]
      %v208 = vld [vmem:[%s172 + $0x64] sm:$0xf]
      %v209 = vld [vmem:[%s172 + $0x68] sm:$0x1]
      %v210 = vld [vmem:[%s172 + $0x6c] sm:$0xf]
      %v211 = vld [vmem:[%s172 + $0x70] sm:$0xf]
      %v212 = vld [vmem:[%s172 + $0x74] sm:$0x1]
      %v213 = vld [vmem:[%s172 + $0x78] sm:$0xf]
      %v214 = vld [vmem:[%s172 + $0x7c] sm:$0xf]
      %v215 = vld [vmem:[%s172 + $0x80] sm:$0x1]
      %v216 = vld [vmem:[%s172 + $0x84] sm:$0xf]
      %v217 = vld [vmem:[%s172 + $0x88] sm:$0xf]
      %v218 = vld [vmem:[%s172 + $0x8c] sm:$0x1]
      %v219 = vld [vmem:[%s172 + $0x90] sm:$0xf]
      %v220 = vld [vmem:[%s172 + $0x94] sm:$0xf]
      %v221 = vld [vmem:[%s172 + $0x98] sm:$0x1]
      %v222 = vld [vmem:[%s172 + $0x9c] sm:$0xf]
      %v223 = vld [vmem:[%s172 + $0xa0] sm:$0xf]
      %v224 = vld [vmem:[%s172 + $0xa4] sm:$0x1]
      %v225 = vld [vmem:[%s172 + $0xa8] sm:$0xf]
      %v226 = vld [vmem:[%s172 + $0xac] sm:$0xf]
      %v227 = vld [vmem:[%s172 + $0xb0] sm:$0x1]
      %v228 = vld [vmem:[%s172 + $0xb4] sm:$0xf]
      %v229 = vld [vmem:[%s172 + $0xb8] sm:$0xf]
      %v230 = vld [vmem:[%s172 + $0xbc] sm:$0x1]
      %v231 = vld [vmem:[%s172 + $0xc0] sm:$0xf]
      %v232 = vld [vmem:[%s172 + $0xc4] sm:$0xf]
      %v233 = vld [vmem:[%s172 + $0xc8] sm:$0x1]
      %v234 = vld [vmem:[%s1] sm:$0xf]
      %v235 = vld [vmem:[%s1 + $0x4] sm:$0xf]
      %v236 = vld [vmem:[%s1 + $0x8] sm:$0xf]
      %v237 = vld [vmem:[%s1 + $0xc] sm:$0xf]
      %v238 = vld [vmem:[%s1 + $0x10] sm:$0xf]
      %v239 = vld [vmem:[%s1 + $0x14] sm:$0xf]
      %v240 = vld [vmem:[%s1 + $0x18] sm:$0xf]
      %v241 = vld [vmem:[%s1 + $0x1c] sm:$0xf]
      %v242 = vld [vmem:[%s1 + $0x20] sm:$0xf]
      %v243 = vld [vmem:[%s1 + $0x24] sm:$0xf]
      %v244 = vld [vmem:[%s1 + $0x28] sm:$0xf]
      %v245 = vld [vmem:[%s1 + $0x2c] sm:$0xf]
      %v246 = vld [vmem:[%s1 + $0x30] sm:$0xf]
      %v247 = vld [vmem:[%s1 + $0x34] sm:$0xf]
      %v248 = vld [vmem:[%s1 + $0x38] sm:$0xf]
      %v249 = vld [vmem:[%s1 + $0x3c] sm:$0xf]
      %v282 = vunpack.c.l.b16 %v183
      %v283 = vunpack.c.l.b16 %v184
      %v284 = vunpack.c.l.b16 %v186
      %v285 = vunpack.c.l.b16 %v187
      %v286 = vunpack.c.l.b16 %v189
      %v287 = vunpack.c.l.b16 %v190
      %v288 = vunpack.c.l.b16 %v192
      %v289 = vunpack.c.l.b16 %v193
      %v290 = vunpack.c.l.b16 %v195
      %v291 = vunpack.c.l.b16 %v196
      %v292 = vunpack.c.l.b16 %v198
      %v293 = vunpack.c.l.b16 %v199
      %v294 = vunpack.c.l.b16 %v201
      %v295 = vunpack.c.l.b16 %v202
      %v296 = vunpack.c.l.b16 %v204
      %v297 = vunpack.c.l.b16 %v205
      %v298 = vunpack.c.l.b16 %v207
      %v299 = vunpack.c.l.b16 %v208
      %v300 = vunpack.c.l.b16 %v210
      %v301 = vunpack.c.l.b16 %v211
      %v302 = vunpack.c.l.b16 %v213
      %v303 = vunpack.c.l.b16 %v214
      %v304 = vunpack.c.l.b16 %v216
      %v305 = vunpack.c.l.b16 %v217
      %v306 = vunpack.c.l.b16 %v219
      %v307 = vunpack.c.l.b16 %v220
      %v308 = vunpack.c.l.b16 %v222
      %v309 = vunpack.c.l.b16 %v223
      %v310 = vunpack.c.l.b16 %v225
      %v311 = vunpack.c.l.b16 %v226
      %v312 = vunpack.c.l.b16 %v228
      %v313 = vunpack.c.l.b16 %v229
      %v314 = vpack.c.b16 %v283, %v282
      %v315 = vpack.c.b16 %v285, %v284
      %v316 = vpack.c.b16 %v287, %v286
      %v317 = vpack.c.b16 %v289, %v288
      %v318 = vpack.c.b16 %v291, %v290
      %v319 = vpack.c.b16 %v293, %v292
      %v320 = vpack.c.b16 %v295, %v294
      %v321 = vpack.c.b16 %v297, %v296
      %v322 = vpack.c.b16 %v299, %v298
      %v323 = vpack.c.b16 %v301, %v300
      %v324 = vpack.c.b16 %v303, %v302
      %v325 = vpack.c.b16 %v305, %v304
      %v326 = vpack.c.b16 %v307, %v306
      %v327 = vpack.c.b16 %v309, %v308
      %v328 = vpack.c.b16 %v311, %v310
      %v329 = vpack.c.b16 %v313, %v312
      %v362 = vunpack.c.l.b16 %v234
      %v363 = vunpack.c.l.b16 %v235
      %v364 = vunpack.c.l.b16 %v236
      %v365 = vunpack.c.l.b16 %v237
      %v366 = vunpack.c.l.b16 %v238
      %v367 = vunpack.c.l.b16 %v239
      %v368 = vunpack.c.l.b16 %v240
      %v369 = vunpack.c.l.b16 %v241
      %v370 = vunpack.c.l.b16 %v242
      %v371 = vunpack.c.l.b16 %v243
      %v372 = vunpack.c.l.b16 %v244
      %v373 = vunpack.c.l.b16 %v245
      %v374 = vunpack.c.l.b16 %v246
      %v375 = vunpack.c.l.b16 %v247
      %v376 = vunpack.c.l.b16 %v248
      %v377 = vunpack.c.l.b16 %v249
      %v378 = vpack.c.b16 %v363, %v362
      %v379 = vpack.c.b16 %v365, %v364
      %v380 = vpack.c.b16 %v367, %v366
      %v381 = vpack.c.b16 %v369, %v368
      %v382 = vpack.c.b16 %v371, %v370
      %v383 = vpack.c.b16 %v373, %v372
      %v384 = vpack.c.b16 %v375, %v374
      %v385 = vpack.c.b16 %v377, %v376
      %394 = vmatprep.subr.bf16.mxu0 0
      %395 = vmatpush1.bf16.msra.mxu0 %v385
      %396 = vmatprep.subr.bf16.mxu0 0
      %397 = vmatpush1.bf16.msra.mxu0 %v384
      %398 = vmatprep.subr.bf16.mxu0 0
      %399 = vmatpush1.bf16.msra.mxu0 %v383
      %400 = vmatprep.subr.bf16.mxu0 0
      %401 = vmatpush1.bf16.msra.mxu0 %v382
      %402 = vmatprep.subr.bf16.mxu0 0
      %403 = vmatpush1.bf16.msra.mxu0 %v381
      %404 = vmatprep.subr.bf16.mxu0 0
      %405 = vmatpush1.bf16.msra.mxu0 %v380
      %406 = vmatprep.subr.bf16.mxu0 0
      %407 = vmatpush1.bf16.msra.mxu0 %v379
      %408 = vmatprep.subr.bf16.mxu0 0
      %409 = vmatpush1.bf16.msra.mxu0 %v378
      %410 = vmatprep.subr.bf16.mxu0 0
      %411 = vmatpush2.bf16.msra.mxu0 0
      %412 = vmatprep.subr.bf16.mxu0 0
      %413 = vmatpush2.bf16.msra.mxu0 0
      %414 = vmatprep.subr.bf16.mxu0 0
      %415 = vmatpush2.bf16.msra.mxu0 0
      %416 = vmatprep.subr.bf16.mxu0 0
      %417 = vmatpush2.bf16.msra.mxu0 0
      %418 = vmatprep.subr.bf16.mxu0 0
      %419 = vmatpush2.bf16.msra.mxu0 0
      %420 = vmatprep.subr.bf16.mxu0 0
      %421 = vmatpush2.bf16.msra.mxu0 0
      %422 = vmatprep.subr.bf16.mxu0 0
      %423 = vmatpush2.bf16.msra.mxu0 0
      %424 = vmatprep.subr.bf16.mxu0 0
      %425 = vmatpush2.bf16.msra.mxu0 0
      %426 = vmatprep.mubr.bf16.mxu0 0
      %427 = vmatmul.mubr.bf16.gmra.mxu0 %v314
      %v428 = vpop.f32.mrf.mxu0
      %v429 = vadd.f32 0.0, %v428
      %v430 = vpop.f32.mrf.mxu0
      %v431 = vpop.f32.mrf.mxu0
      %v432 = vadd.f32 0.0, %v431
      %v433 = vpop.f32.mrf.mxu0
      %434 = vmatprep.mubr.bf16.mxu0 0
      %435 = vmatmul.mubr.bf16.gmra.mxu0 %v315
      %v436 = vpop.f32.mrf.mxu0
      %v437 = vadd.f32 0.0, %v436
      %v438 = vpop.f32.mrf.mxu0
      %v439 = vpop.f32.mrf.mxu0
      %v440 = vadd.f32 0.0, %v439
      %v441 = vpop.f32.mrf.mxu0
      %442 = vmatprep.mubr.bf16.mxu0 0
      %443 = vmatmul.mubr.bf16.gmra.mxu0 %v316
      %v444 = vpop.f32.mrf.mxu0
      %v445 = vadd.f32 0.0, %v444
      %v446 = vpop.f32.mrf.mxu0
      %v447 = vpop.f32.mrf.mxu0
      %v448 = vadd.f32 0.0, %v447
      %v449 = vpop.f32.mrf.mxu0
      %450 = vmatprep.mubr.bf16.mxu0 0
      %451 = vmatmul.mubr.bf16.gmra.mxu0 %v317
      %v452 = vpop.f32.mrf.mxu0
      %v453 = vadd.f32 0.0, %v452
      %v454 = vpop.f32.mrf.mxu0
      %v455 = vpop.f32.mrf.mxu0
      %v456 = vadd.f32 0.0, %v455
      %v457 = vpop.f32.mrf.mxu0
      %458 = vmatprep.mubr.bf16.mxu0 0
      %459 = vmatmul.mubr.bf16.gmra.mxu0 %v318
      %v460 = vpop.f32.mrf.mxu0
      %v461 = vadd.f32 0.0, %v460
      %v462 = vpop.f32.mrf.mxu0
      %v463 = vpop.f32.mrf.mxu0
      %v464 = vadd.f32 0.0, %v463
      %v465 = vpop.f32.mrf.mxu0
      %466 = vmatprep.mubr.bf16.mxu0 0
      %467 = vmatmul.mubr.bf16.gmra.mxu0 %v319
      %v468 = vpop.f32.mrf.mxu0
      %v469 = vadd.f32 0.0, %v468
      %v470 = vpop.f32.mrf.mxu0
      %v471 = vpop.f32.mrf.mxu0
      %v472 = vadd.f32 0.0, %v471
      %v473 = vpop.f32.mrf.mxu0
      %474 = vmatprep.mubr.bf16.mxu0 0
      %475 = vmatmul.mubr.bf16.gmra.mxu0 %v320
      %v476 = vpop.f32.mrf.mxu0
      %v477 = vadd.f32 0.0, %v476
      %v478 = vpop.f32.mrf.mxu0
      %v479 = vpop.f32.mrf.mxu0
      %v480 = vadd.f32 0.0, %v479
      %v481 = vpop.f32.mrf.mxu0
      %482 = vmatprep.mubr.bf16.mxu0 0
      %483 = vmatmul.mubr.bf16.gmra.mxu0 %v321
      %v484 = vpop.f32.mrf.mxu0
      %v485 = vadd.f32 0.0, %v484
      %v486 = vpop.f32.mrf.mxu0
      %v487 = vpop.f32.mrf.mxu0
      %v488 = vadd.f32 0.0, %v487
      %v489 = vpop.f32.mrf.mxu0
      %490 = vmatprep.mubr.bf16.mxu0 0
      %491 = vmatmul.mubr.bf16.gmra.mxu0 %v322
      %v492 = vpop.f32.mrf.mxu0
      %v493 = vadd.f32 0.0, %v492
      %v494 = vpop.f32.mrf.mxu0
      %v495 = vpop.f32.mrf.mxu0
      %v496 = vadd.f32 0.0, %v495
      %v497 = vpop.f32.mrf.mxu0
      %498 = vmatprep.mubr.bf16.mxu0 0
      %499 = vmatmul.mubr.bf16.gmra.mxu0 %v323
      %v500 = vpop.f32.mrf.mxu0
      %v501 = vadd.f32 0.0, %v500
      %v502 = vpop.f32.mrf.mxu0
      %v503 = vpop.f32.mrf.mxu0
      %v504 = vadd.f32 0.0, %v503
      %v505 = vpop.f32.mrf.mxu0
      %506 = vmatprep.mubr.bf16.mxu0 0
      %507 = vmatmul.mubr.bf16.gmra.mxu0 %v324
      %v508 = vpop.f32.mrf.mxu0
      %v509 = vadd.f32 0.0, %v508
      %v510 = vpop.f32.mrf.mxu0
      %v511 = vpop.f32.mrf.mxu0
      %v512 = vadd.f32 0.0, %v511
      %v513 = vpop.f32.mrf.mxu0
      %514 = vmatprep.mubr.bf16.mxu0 0
      %515 = vmatmul.mubr.bf16.gmra.mxu0 %v325
      %v516 = vpop.f32.mrf.mxu0
      %v517 = vadd.f32 0.0, %v516
      %v518 = vpop.f32.mrf.mxu0
      %v519 = vpop.f32.mrf.mxu0
      %v520 = vadd.f32 0.0, %v519
      %v521 = vpop.f32.mrf.mxu0
      %522 = vmatprep.mubr.bf16.mxu0 0
      %523 = vmatmul.mubr.bf16.gmra.mxu0 %v326
      %v524 = vpop.f32.mrf.mxu0
      %v525 = vadd.f32 0.0, %v524
      %v526 = vpop.f32.mrf.mxu0
      %v527 = vpop.f32.mrf.mxu0
      %v528 = vadd.f32 0.0, %v527
      %v529 = vpop.f32.mrf.mxu0
      %530 = vmatprep.mubr.bf16.mxu0 0
      %531 = vmatmul.mubr.bf16.gmra.mxu0 %v327
      %v532 = vpop.f32.mrf.mxu0
      %v533 = vadd.f32 0.0, %v532
      %v534 = vpop.f32.mrf.mxu0
      %v535 = vpop.f32.mrf.mxu0
      %v536 = vadd.f32 0.0, %v535
      %v537 = vpop.f32.mrf.mxu0
      %538 = vmatprep.mubr.bf16.mxu0 0
      %539 = vmatmul.mubr.bf16.gmra.mxu0 %v328
      %v540 = vpop.f32.mrf.mxu0
      %v541 = vadd.f32 0.0, %v540
      %v542 = vpop.f32.mrf.mxu0
      %v543 = vpop.f32.mrf.mxu0
      %v544 = vadd.f32 0.0, %v543
      %v545 = vpop.f32.mrf.mxu0
      %546 = vmatprep.mubr.bf16.mxu0 0
      %547 = vmatmul.mubr.bf16.gmra.mxu0 %v329
      %v548 = vpop.f32.mrf.mxu0
      %v549 = vadd.f32 0.0, %v548
      %v550 = vpop.f32.mrf.mxu0
      %v551 = vpop.f32.mrf.mxu0
      %v552 = vadd.f32 0.0, %v551
      %v553 = vpop.f32.mrf.mxu0
      %554 = vdwg.mxu0
      %v555 = vpack.c.bf16 %v432, %v429
      %v556 = vpack.c.bf16 %v440, %v437
      %v557 = vpack.c.bf16 %v448, %v445
      %v558 = vpack.c.bf16 %v456, %v453
      %v559 = vpack.c.bf16 %v464, %v461
      %v560 = vpack.c.bf16 %v472, %v469
      %v561 = vpack.c.bf16 %v480, %v477
      %v562 = vpack.c.bf16 %v488, %v485
      %v563 = vpack.c.bf16 %v496, %v493
      %v564 = vpack.c.bf16 %v504, %v501
      %v565 = vpack.c.bf16 %v512, %v509
      %v566 = vpack.c.bf16 %v520, %v517
      %v567 = vpack.c.bf16 %v528, %v525
      %v568 = vpack.c.bf16 %v536, %v533
      %v569 = vpack.c.bf16 %v544, %v541
      %v570 = vpack.c.bf16 %v552, %v549
      %v587 = vunpack.c.l.b16 %v555
      %v588 = vunpack.c.h.b16 %v555
      %v589 = vunpack.c.l.b16 %v556
      %v590 = vunpack.c.h.b16 %v556
      %v591 = vunpack.c.l.b16 %v557
      %v592 = vunpack.c.h.b16 %v557
      %v593 = vunpack.c.l.b16 %v558
      %v594 = vunpack.c.h.b16 %v558
      %v595 = vunpack.c.l.b16 %v559
      %v596 = vunpack.c.h.b16 %v559
      %v597 = vunpack.c.l.b16 %v560
      %v598 = vunpack.c.h.b16 %v560
      %v599 = vunpack.c.l.b16 %v561
      %v600 = vunpack.c.h.b16 %v561
      %v601 = vunpack.c.l.b16 %v562
      %v602 = vunpack.c.h.b16 %v562
      %v603 = vunpack.c.l.b16 %v563
      %v604 = vunpack.c.h.b16 %v563
      %v605 = vunpack.c.l.b16 %v564
      %v606 = vunpack.c.h.b16 %v564
      %v607 = vunpack.c.l.b16 %v565
      %v608 = vunpack.c.h.b16 %v565
      %v609 = vunpack.c.l.b16 %v566
      %v610 = vunpack.c.h.b16 %v566
      %v611 = vunpack.c.l.b16 %v567
      %v612 = vunpack.c.h.b16 %v567
      %v613 = vunpack.c.l.b16 %v568
      %v614 = vunpack.c.h.b16 %v568
      %v615 = vunpack.c.l.b16 %v569
      %v616 = vunpack.c.h.b16 %v569
      %v617 = vunpack.c.l.b16 %v570
      %v618 = vunpack.c.h.b16 %v570
      %v619 = vpack.c.b16 %v587, %v587
      %v620 = vpack.c.b16 %v588, %v588
      %v621 = vpack.c.b16 %v589, %v589
      %v622 = vpack.c.b16 %v590, %v590
      %v623 = vpack.c.b16 %v591, %v591
      %v624 = vpack.c.b16 %v592, %v592
      %v625 = vpack.c.b16 %v593, %v593
      %v626 = vpack.c.b16 %v594, %v594
      %v627 = vpack.c.b16 %v595, %v595
      %v628 = vpack.c.b16 %v596, %v596
      %v629 = vpack.c.b16 %v597, %v597
      %v630 = vpack.c.b16 %v598, %v598
      %v631 = vpack.c.b16 %v599, %v599
      %v632 = vpack.c.b16 %v600, %v600
      %v633 = vpack.c.b16 %v601, %v601
      %v634 = vpack.c.b16 %v602, %v602
      %v635 = vpack.c.b16 %v603, %v603
      %v636 = vpack.c.b16 %v604, %v604
      %v637 = vpack.c.b16 %v605, %v605
      %v638 = vpack.c.b16 %v606, %v606
      %v639 = vpack.c.b16 %v607, %v607
      %v640 = vpack.c.b16 %v608, %v608
      %v641 = vpack.c.b16 %v609, %v609
      %v642 = vpack.c.b16 %v610, %v610
      %v643 = vpack.c.b16 %v611, %v611
      %v644 = vpack.c.b16 %v612, %v612
      %v645 = vpack.c.b16 %v613, %v613
      %v646 = vpack.c.b16 %v614, %v614
      %v647 = vpack.c.b16 %v615, %v615
      %v648 = vpack.c.b16 %v616, %v616
      %v649 = vpack.c.b16 %v617, %v617
      %v650 = vpack.c.b16 %v618, %v618
      %683 = vst [vmem:[%s177] sm:$0xf] %v619
      %684 = vst [vmem:[%s177 + $0x4] sm:$0xf] %v620
      %685 = vst [vmem:[%s177 + $0x8] sm:$0xf] %v621
      %686 = vst [vmem:[%s177 + $0xc] sm:$0xf] %v622
      %687 = vst [vmem:[%s177 + $0x10] sm:$0xf] %v623
      %688 = vst [vmem:[%s177 + $0x14] sm:$0xf] %v624
      %689 = vst [vmem:[%s177 + $0x18] sm:$0xf] %v625
      %690 = vst [vmem:[%s177 + $0x1c] sm:$0xf] %v626
      %691 = vst [vmem:[%s177 + $0x20] sm:$0xf] %v627
      %692 = vst [vmem:[%s177 + $0x24] sm:$0xf] %v628
      %693 = vst [vmem:[%s177 + $0x28] sm:$0xf] %v629
      %694 = vst [vmem:[%s177 + $0x2c] sm:$0xf] %v630
      %695 = vst [vmem:[%s177 + $0x30] sm:$0xf] %v631
      %696 = vst [vmem:[%s177 + $0x34] sm:$0xf] %v632
      %697 = vst [vmem:[%s177 + $0x38] sm:$0xf] %v633
      %698 = vst [vmem:[%s177 + $0x3c] sm:$0xf] %v634
      %699 = vst [vmem:[%s177 + $0x40] sm:$0xf] %v635
      %700 = vst [vmem:[%s177 + $0x44] sm:$0xf] %v636
      %701 = vst [vmem:[%s177 + $0x48] sm:$0xf] %v637
      %702 = vst [vmem:[%s177 + $0x4c] sm:$0xf] %v638
      %703 = vst [vmem:[%s177 + $0x50] sm:$0xf] %v639
      %704 = vst [vmem:[%s177 + $0x54] sm:$0xf] %v640
      %705 = vst [vmem:[%s177 + $0x58] sm:$0xf] %v641
      %706 = vst [vmem:[%s177 + $0x5c] sm:$0xf] %v642
      %707 = vst [vmem:[%s177 + $0x60] sm:$0xf] %v643
      %708 = vst [vmem:[%s177 + $0x64] sm:$0xf] %v644
      %709 = vst [vmem:[%s177 + $0x68] sm:$0xf] %v645
      %710 = vst [vmem:[%s177 + $0x6c] sm:$0xf] %v646
      %711 = vst [vmem:[%s177 + $0x70] sm:$0xf] %v647
      %712 = vst [vmem:[%s177 + $0x74] sm:$0xf] %v648
      %713 = vst [vmem:[%s177 + $0x78] sm:$0xf] %v649
      %714 = vst [vmem:[%s177 + $0x7c] sm:$0xf] %v650
      %v715 = vadd.f32 %v429, %v432
      %v716 = vadd.f32 %v715, %v437
      %v717 = vadd.f32 %v716, %v440
      %v718 = vadd.f32 %v717, %v445
      %v719 = vadd.f32 %v718, %v448
      %v720 = vadd.f32 %v719, %v453
      %v721 = vadd.f32 %v720, %v456
      %v722 = vadd.f32 %v721, %v461
      %v723 = vadd.f32 %v722, %v464
      %v724 = vadd.f32 %v723, %v469
      %v725 = vadd.f32 %v724, %v472
      %v726 = vadd.f32 %v725, %v477
      %v727 = vadd.f32 %v726, %v480
      %v728 = vadd.f32 %v727, %v485
      %v729 = vadd.f32 %v728, %v488
      %v730 = vadd.f32 %v729, %v493
      %v731 = vadd.f32 %v730, %v496
      %v732 = vadd.f32 %v731, %v501
      %v733 = vadd.f32 %v732, %v504
      %v734 = vadd.f32 %v733, %v509
      %v735 = vadd.f32 %v734, %v512
      %v736 = vadd.f32 %v735, %v517
      %v737 = vadd.f32 %v736, %v520
      %v738 = vadd.f32 %v737, %v525
      %v739 = vadd.f32 %v738, %v528
      %v740 = vadd.f32 %v739, %v533
      %v741 = vadd.f32 %v740, %v536
      %v742 = vadd.f32 %v741, %v541
      %v743 = vadd.f32 %v742, %v544
      %v744 = vadd.f32 %v743, %v549
      %v745 = vadd.f32 %v744, %v552
      %v746 = vrot.slane %v745, 4
      %v747 = vadd.f32 %v745, %v746
      %v748 = vrot.slane %v747, 2
      %v749 = vadd.f32 %v747, %v748
      %v750 = vrot.slane %v749, 1
      %v751 = vadd.f32 %v749, %v750
      %v752 = vadd.f32 %v751, 0.0
      %v753 = vmul.f32 %v429, %v429
      %v754 = vmul.f32 %v432, %v432
      %v755 = vmul.f32 %v437, %v437
      %v756 = vmul.f32 %v440, %v440
      %v757 = vmul.f32 %v445, %v445
      %v758 = vmul.f32 %v448, %v448
      %v759 = vmul.f32 %v453, %v453
      %v760 = vmul.f32 %v456, %v456
      %v761 = vmul.f32 %v461, %v461
      %v762 = vmul.f32 %v464, %v464
      %v763 = vmul.f32 %v469, %v469
      %v764 = vmul.f32 %v472, %v472
      %v765 = vmul.f32 %v477, %v477
      %v766 = vmul.f32 %v480, %v480
      %v767 = vmul.f32 %v485, %v485
      %v768 = vmul.f32 %v488, %v488
      %v769 = vmul.f32 %v493, %v493
      %v770 = vmul.f32 %v496, %v496
      %v771 = vmul.f32 %v501, %v501
      %v772 = vmul.f32 %v504, %v504
      %v773 = vmul.f32 %v509, %v509
      %v774 = vmul.f32 %v512, %v512
      %v775 = vmul.f32 %v517, %v517
      %v776 = vmul.f32 %v520, %v520
      %v777 = vmul.f32 %v525, %v525
      %v778 = vmul.f32 %v528, %v528
      %v779 = vmul.f32 %v533, %v533
      %v780 = vmul.f32 %v536, %v536
      %v781 = vmul.f32 %v541, %v541
      %v782 = vmul.f32 %v544, %v544
      %v783 = vmul.f32 %v549, %v549
      %v784 = vmul.f32 %v552, %v552
      %v785 = vadd.f32 %v753, %v754
      %v786 = vadd.f32 %v785, %v755
      %v787 = vadd.f32 %v786, %v756
      %v788 = vadd.f32 %v787, %v757
      %v789 = vadd.f32 %v788, %v758
      %v790 = vadd.f32 %v789, %v759
      %v791 = vadd.f32 %v790, %v760
      %v792 = vadd.f32 %v791, %v761
      %v793 = vadd.f32 %v792, %v762
      %v794 = vadd.f32 %v793, %v763
      %v795 = vadd.f32 %v794, %v764
      %v796 = vadd.f32 %v795, %v765
      %v797 = vadd.f32 %v796, %v766
      %v798 = vadd.f32 %v797, %v767
      %v799 = vadd.f32 %v798, %v768
      %v800 = vadd.f32 %v799, %v769
      %v801 = vadd.f32 %v800, %v770
      %v802 = vadd.f32 %v801, %v771
      %v803 = vadd.f32 %v802, %v772
      %v804 = vadd.f32 %v803, %v773
      %v805 = vadd.f32 %v804, %v774
      %v806 = vadd.f32 %v805, %v775
      %v807 = vadd.f32 %v806, %v776
      %v808 = vadd.f32 %v807, %v777
      %v809 = vadd.f32 %v808, %v778
      %v810 = vadd.f32 %v809, %v779
      %v811 = vadd.f32 %v810, %v780
      %v812 = vadd.f32 %v811, %v781
      %v813 = vadd.f32 %v812, %v782
      %v814 = vadd.f32 %v813, %v783
      %v815 = vadd.f32 %v814, %v784
      %v816 = vrot.slane %v815, 4
      %v817 = vadd.f32 %v815, %v816
      %v818 = vrot.slane %v817, 2
      %v819 = vadd.f32 %v817, %v818
      %v820 = vrot.slane %v819, 1
      %v821 = vadd.f32 %v819, %v820
      %v822 = vadd.f32 %v821, 0.0
      %vm823 = vsmask.f32 3328
      %vm824 = vsmask.f32 7440
      %vm825 = vmor %vm823, %vm824
      %v827 = vshrl.u32 %v183, 16
      %v829 = vrot.slane %v827, 4
      %v830 = vshll.u32 %v183, 16
      %v832 = vrot.slane %v830, 5
      %v833 = vor.u32 %v829, %v832
      %v834 = vrot.slane %v833, 4
      %v836 = vshll.u32 %v184, 16
      %v838 = vrot.slane %v836, 5
      %v839 = vsel %vm825, %v834, %v838
      %v840 = vshrl.u32 %v184, 16
      %v842 = vrot.slane %v840, 4
      %v843 = vor.u32 %v842, %v838
      %v844 = vrot.slane %v843, 4
      %v846 = vshll.u32 %v185, 16
      %v848 = vrot.slane %v846, 5
      %v849 = vsel %vm825, %v844, %v848
      %v851 = vshrl.u32 %v186, 16
      %v853 = vrot.slane %v851, 4
      %v854 = vshll.u32 %v186, 16
      %v856 = vrot.slane %v854, 5
      %v857 = vor.u32 %v853, %v856
      %v858 = vrot.slane %v857, 4
      %v860 = vshll.u32 %v187, 16
      %v862 = vrot.slane %v860, 5
      %v863 = vsel %vm825, %v858, %v862
      %v864 = vshrl.u32 %v187, 16
      %v866 = vrot.slane %v864, 4
      %v867 = vor.u32 %v866, %v862
      %v868 = vrot.slane %v867, 4
      %v870 = vshll.u32 %v188, 16
      %v872 = vrot.slane %v870, 5
      %v873 = vsel %vm825, %v868, %v872
      %v875 = vshrl.u32 %v189, 16
      %v877 = vrot.slane %v875, 4
      %v878 = vshll.u32 %v189, 16
      %v880 = vrot.slane %v878, 5
      %v881 = vor.u32 %v877, %v880
      %v882 = vrot.slane %v881, 4
      %v884 = vshll.u32 %v190, 16
      %v886 = vrot.slane %v884, 5
      %v887 = vsel %vm825, %v882, %v886
      %v888 = vshrl.u32 %v190, 16
      %v890 = vrot.slane %v888, 4
      %v891 = vor.u32 %v890, %v886
      %v892 = vrot.slane %v891, 4
      %v894 = vshll.u32 %v191, 16
      %v896 = vrot.slane %v894, 5
      %v897 = vsel %vm825, %v892, %v896
      %v899 = vshrl.u32 %v192, 16
      %v901 = vrot.slane %v899, 4
      %v902 = vshll.u32 %v192, 16
      %v904 = vrot.slane %v902, 5
      %v905 = vor.u32 %v901, %v904
      %v906 = vrot.slane %v905, 4
      %v908 = vshll.u32 %v193, 16
      %v910 = vrot.slane %v908, 5
      %v911 = vsel %vm825, %v906, %v910
      %v912 = vshrl.u32 %v193, 16
      %v914 = vrot.slane %v912, 4
      %v915 = vor.u32 %v914, %v910
      %v916 = vrot.slane %v915, 4
      %v918 = vshll.u32 %v194, 16
      %v920 = vrot.slane %v918, 5
      %v921 = vsel %vm825, %v916, %v920
      %v923 = vshrl.u32 %v195, 16
      %v925 = vrot.slane %v923, 4
      %v926 = vshll.u32 %v195, 16
      %v928 = vrot.slane %v926, 5
      %v929 = vor.u32 %v925, %v928
      %v930 = vrot.slane %v929, 4
      %v932 = vshll.u32 %v196, 16
      %v934 = vrot.slane %v932, 5
      %v935 = vsel %vm825, %v930, %v934
      %v936 = vshrl.u32 %v196, 16
      %v938 = vrot.slane %v936, 4
      %v939 = vor.u32 %v938, %v934
      %v940 = vrot.slane %v939, 4
      %v942 = vshll.u32 %v197, 16
      %v944 = vrot.slane %v942, 5
      %v945 = vsel %vm825, %v940, %v944
      %v947 = vshrl.u32 %v198, 16
      %v949 = vrot.slane %v947, 4
      %v950 = vshll.u32 %v198, 16
      %v952 = vrot.slane %v950, 5
      %v953 = vor.u32 %v949, %v952
      %v954 = vrot.slane %v953, 4
      %v956 = vshll.u32 %v199, 16
      %v958 = vrot.slane %v956, 5
      %v959 = vsel %vm825, %v954, %v958
      %v960 = vshrl.u32 %v199, 16
      %v962 = vrot.slane %v960, 4
      %v963 = vor.u32 %v962, %v958
      %v964 = vrot.slane %v963, 4
      %v966 = vshll.u32 %v200, 16
      %v968 = vrot.slane %v966, 5
      %v969 = vsel %vm825, %v964, %v968
      %v971 = vshrl.u32 %v201, 16
      %v973 = vrot.slane %v971, 4
      %v974 = vshll.u32 %v201, 16
      %v976 = vrot.slane %v974, 5
      %v977 = vor.u32 %v973, %v976
      %v978 = vrot.slane %v977, 4
      %v980 = vshll.u32 %v202, 16
      %v982 = vrot.slane %v980, 5
      %v983 = vsel %vm825, %v978, %v982
      %v984 = vshrl.u32 %v202, 16
      %v986 = vrot.slane %v984, 4
      %v987 = vor.u32 %v986, %v982
      %v988 = vrot.slane %v987, 4
      %v990 = vshll.u32 %v203, 16
      %v992 = vrot.slane %v990, 5
      %v993 = vsel %vm825, %v988, %v992
      %v995 = vshrl.u32 %v204, 16
      %v997 = vrot.slane %v995, 4
      %v998 = vshll.u32 %v204, 16
      %v1000 = vrot.slane %v998, 5
      %v1001 = vor.u32 %v997, %v1000
      %v1002 = vrot.slane %v1001, 4
      %v1004 = vshll.u32 %v205, 16
      %v1006 = vrot.slane %v1004, 5
      %v1007 = vsel %vm825, %v1002, %v1006
      %v1008 = vshrl.u32 %v205, 16
      %v1010 = vrot.slane %v1008, 4
      %v1011 = vor.u32 %v1010, %v1006
      %v1012 = vrot.slane %v1011, 4
      %v1014 = vshll.u32 %v206, 16
      %v1016 = vrot.slane %v1014, 5
      %v1017 = vsel %vm825, %v1012, %v1016
      %v1019 = vshrl.u32 %v207, 16
      %v1021 = vrot.slane %v1019, 4
      %v1022 = vshll.u32 %v207, 16
      %v1024 = vrot.slane %v1022, 5
      %v1025 = vor.u32 %v1021, %v1024
      %v1026 = vrot.slane %v1025, 4
      %v1028 = vshll.u32 %v208, 16
      %v1030 = vrot.slane %v1028, 5
      %v1031 = vsel %vm825, %v1026, %v1030
      %v1032 = vshrl.u32 %v208, 16
      %v1034 = vrot.slane %v1032, 4
      %v1035 = vor.u32 %v1034, %v1030
      %v1036 = vrot.slane %v1035, 4
      %v1038 = vshll.u32 %v209, 16
      %v1040 = vrot.slane %v1038, 5
      %v1041 = vsel %vm825, %v1036, %v1040
      %v1043 = vshrl.u32 %v210, 16
      %v1045 = vrot.slane %v1043, 4
      %v1046 = vshll.u32 %v210, 16
      %v1048 = vrot.slane %v1046, 5
      %v1049 = vor.u32 %v1045, %v1048
      %v1050 = vrot.slane %v1049, 4
      %v1052 = vshll.u32 %v211, 16
      %v1054 = vrot.slane %v1052, 5
      %v1055 = vsel %vm825, %v1050, %v1054
      %v1056 = vshrl.u32 %v211, 16
      %v1058 = vrot.slane %v1056, 4
      %v1059 = vor.u32 %v1058, %v1054
      %v1060 = vrot.slane %v1059, 4
      %v1062 = vshll.u32 %v212, 16
      %v1064 = vrot.slane %v1062, 5
      %v1065 = vsel %vm825, %v1060, %v1064
      %v1067 = vshrl.u32 %v213, 16
      %v1069 = vrot.slane %v1067, 4
      %v1070 = vshll.u32 %v213, 16
      %v1072 = vrot.slane %v1070, 5
      %v1073 = vor.u32 %v1069, %v1072
      %v1074 = vrot.slane %v1073, 4
      %v1076 = vshll.u32 %v214, 16
      %v1078 = vrot.slane %v1076, 5
      %v1079 = vsel %vm825, %v1074, %v1078
      %v1080 = vshrl.u32 %v214, 16
      %v1082 = vrot.slane %v1080, 4
      %v1083 = vor.u32 %v1082, %v1078
      %v1084 = vrot.slane %v1083, 4
      %v1086 = vshll.u32 %v215, 16
      %v1088 = vrot.slane %v1086, 5
      %v1089 = vsel %vm825, %v1084, %v1088
      %v1091 = vshrl.u32 %v216, 16
      %v1093 = vrot.slane %v1091, 4
      %v1094 = vshll.u32 %v216, 16
      %v1096 = vrot.slane %v1094, 5
      %v1097 = vor.u32 %v1093, %v1096
      %v1098 = vrot.slane %v1097, 4
      %v1100 = vshll.u32 %v217, 16
      %v1102 = vrot.slane %v1100, 5
      %v1103 = vsel %vm825, %v1098, %v1102
      %v1104 = vshrl.u32 %v217, 16
      %v1106 = vrot.slane %v1104, 4
      %v1107 = vor.u32 %v1106, %v1102
      %v1108 = vrot.slane %v1107, 4
      %v1110 = vshll.u32 %v218, 16
      %v1112 = vrot.slane %v1110, 5
      %v1113 = vsel %vm825, %v1108, %v1112
      %v1115 = vshrl.u32 %v219, 16
      %v1117 = vrot.slane %v1115, 4
      %v1118 = vshll.u32 %v219, 16
      %v1120 = vrot.slane %v1118, 5
      %v1121 = vor.u32 %v1117, %v1120
      %v1122 = vrot.slane %v1121, 4
      %v1124 = vshll.u32 %v220, 16
      %v1126 = vrot.slane %v1124, 5
      %v1127 = vsel %vm825, %v1122, %v1126
      %v1128 = vshrl.u32 %v220, 16
      %v1130 = vrot.slane %v1128, 4
      %v1131 = vor.u32 %v1130, %v1126
      %v1132 = vrot.slane %v1131, 4
      %v1134 = vshll.u32 %v221, 16
      %v1136 = vrot.slane %v1134, 5
      %v1137 = vsel %vm825, %v1132, %v1136
      %v1139 = vshrl.u32 %v222, 16
      %v1141 = vrot.slane %v1139, 4
      %v1142 = vshll.u32 %v222, 16
      %v1144 = vrot.slane %v1142, 5
      %v1145 = vor.u32 %v1141, %v1144
      %v1146 = vrot.slane %v1145, 4
      %v1148 = vshll.u32 %v223, 16
      %v1150 = vrot.slane %v1148, 5
      %v1151 = vsel %vm825, %v1146, %v1150
      %v1152 = vshrl.u32 %v223, 16
      %v1154 = vrot.slane %v1152, 4
      %v1155 = vor.u32 %v1154, %v1150
      %v1156 = vrot.slane %v1155, 4
      %v1158 = vshll.u32 %v224, 16
      %v1160 = vrot.slane %v1158, 5
      %v1161 = vsel %vm825, %v1156, %v1160
      %v1163 = vshrl.u32 %v225, 16
      %v1165 = vrot.slane %v1163, 4
      %v1166 = vshll.u32 %v225, 16
      %v1168 = vrot.slane %v1166, 5
      %v1169 = vor.u32 %v1165, %v1168
      %v1170 = vrot.slane %v1169, 4
      %v1172 = vshll.u32 %v226, 16
      %v1174 = vrot.slane %v1172, 5
      %v1175 = vsel %vm825, %v1170, %v1174
      %v1176 = vshrl.u32 %v226, 16
      %v1178 = vrot.slane %v1176, 4
      %v1179 = vor.u32 %v1178, %v1174
      %v1180 = vrot.slane %v1179, 4
      %v1182 = vshll.u32 %v227, 16
      %v1184 = vrot.slane %v1182, 5
      %v1185 = vsel %vm825, %v1180, %v1184
      %v1187 = vshrl.u32 %v228, 16
      %v1189 = vrot.slane %v1187, 4
      %v1190 = vshll.u32 %v228, 16
      %v1192 = vrot.slane %v1190, 5
      %v1193 = vor.u32 %v1189, %v1192
      %v1194 = vrot.slane %v1193, 4
      %v1196 = vshll.u32 %v229, 16
      %v1198 = vrot.slane %v1196, 5
      %v1199 = vsel %vm825, %v1194, %v1198
      %v1200 = vshrl.u32 %v229, 16
      %v1202 = vrot.slane %v1200, 4
      %v1203 = vor.u32 %v1202, %v1198
      %v1204 = vrot.slane %v1203, 4
      %v1206 = vshll.u32 %v230, 16
      %v1208 = vrot.slane %v1206, 5
      %v1209 = vsel %vm825, %v1204, %v1208
      %s1210 = scalar_lea.vmem %s1, 64
      %v1211 = vld [vmem:[%s1210] sm:$0xf]
      %v1212 = vld [vmem:[%s1210 + $0x4] sm:$0xf]
      %v1213 = vld [vmem:[%s1210 + $0x8] sm:$0xf]
      %v1214 = vld [vmem:[%s1210 + $0xc] sm:$0xf]
      %v1215 = vld [vmem:[%s1210 + $0x10] sm:$0xf]
      %v1216 = vld [vmem:[%s1210 + $0x14] sm:$0xf]
      %v1217 = vld [vmem:[%s1210 + $0x18] sm:$0xf]
      %v1218 = vld [vmem:[%s1210 + $0x1c] sm:$0xf]
      %v1219 = vld [vmem:[%s1210 + $0x20] sm:$0xf]
      %v1220 = vld [vmem:[%s1210 + $0x24] sm:$0xf]
      %v1221 = vld [vmem:[%s1210 + $0x28] sm:$0xf]
      %v1222 = vld [vmem:[%s1210 + $0x2c] sm:$0xf]
      %v1223 = vld [vmem:[%s1210 + $0x30] sm:$0xf]
      %v1224 = vld [vmem:[%s1210 + $0x34] sm:$0xf]
      %v1225 = vld [vmem:[%s1210 + $0x38] sm:$0xf]
      %v1226 = vld [vmem:[%s1210 + $0x3c] sm:$0xf]
      %v1227 = vunpack.c.l.b16 %v839
      %v1228 = vunpack.c.l.b16 %v849
      %v1229 = vunpack.c.l.b16 %v863
      %v1230 = vunpack.c.l.b16 %v873
      %v1231 = vunpack.c.l.b16 %v887
      %v1232 = vunpack.c.l.b16 %v897
      %v1233 = vunpack.c.l.b16 %v911
      %v1234 = vunpack.c.l.b16 %v921
      %v1235 = vunpack.c.l.b16 %v935
      %v1236 = vunpack.c.l.b16 %v945
      %v1237 = vunpack.c.l.b16 %v959
      %v1238 = vunpack.c.l.b16 %v969
      %v1239 = vunpack.c.l.b16 %v983
      %v1240 = vunpack.c.l.b16 %v993
      %v1241 = vunpack.c.l.b16 %v1007
      %v1242 = vunpack.c.l.b16 %v1017
      %v1243 = vunpack.c.l.b16 %v1031
      %v1244 = vunpack.c.l.b16 %v1041
      %v1245 = vunpack.c.l.b16 %v1055
      %v1246 = vunpack.c.l.b16 %v1065
      %v1247 = vunpack.c.l.b16 %v1079
      %v1248 = vunpack.c.l.b16 %v1089
      %v1249 = vunpack.c.l.b16 %v1103
      %v1250 = vunpack.c.l.b16 %v1113
      %v1251 = vunpack.c.l.b16 %v1127
      %v1252 = vunpack.c.l.b16 %v1137
      %v1253 = vunpack.c.l.b16 %v1151
      %v1254 = vunpack.c.l.b16 %v1161
      %v1255 = vunpack.c.l.b16 %v1175
      %v1256 = vunpack.c.l.b16 %v1185
      %v1257 = vunpack.c.l.b16 %v1199
      %v1258 = vunpack.c.l.b16 %v1209
      %v1259 = vpack.c.b16 %v1228, %v1227
      %v1260 = vpack.c.b16 %v1230, %v1229
      %v1261 = vpack.c.b16 %v1232, %v1231
      %v1262 = vpack.c.b16 %v1234, %v1233
      %v1263 = vpack.c.b16 %v1236, %v1235
      %v1264 = vpack.c.b16 %v1238, %v1237
      %v1265 = vpack.c.b16 %v1240, %v1239
      %v1266 = vpack.c.b16 %v1242, %v1241
      %v1267 = vpack.c.b16 %v1244, %v1243
      %v1268 = vpack.c.b16 %v1246, %v1245
      %v1269 = vpack.c.b16 %v1248, %v1247
      %v1270 = vpack.c.b16 %v1250, %v1249
      %v1271 = vpack.c.b16 %v1252, %v1251
      %v1272 = vpack.c.b16 %v1254, %v1253
      %v1273 = vpack.c.b16 %v1256, %v1255
      %v1274 = vpack.c.b16 %v1258, %v1257
      %v1307 = vunpack.c.l.b16 %v1211
      %v1308 = vunpack.c.l.b16 %v1212
      %v1309 = vunpack.c.l.b16 %v1213
      %v1310 = vunpack.c.l.b16 %v1214
      %v1311 = vunpack.c.l.b16 %v1215
      %v1312 = vunpack.c.l.b16 %v1216
      %v1313 = vunpack.c.l.b16 %v1217
      %v1314 = vunpack.c.l.b16 %v1218
      %v1315 = vunpack.c.l.b16 %v1219
      %v1316 = vunpack.c.l.b16 %v1220
      %v1317 = vunpack.c.l.b16 %v1221
      %v1318 = vunpack.c.l.b16 %v1222
      %v1319 = vunpack.c.l.b16 %v1223
      %v1320 = vunpack.c.l.b16 %v1224
      %v1321 = vunpack.c.l.b16 %v1225
      %v1322 = vunpack.c.l.b16 %v1226
      %v1323 = vpack.c.b16 %v1308, %v1307
      %v1324 = vpack.c.b16 %v1310, %v1309
      %v1325 = vpack.c.b16 %v1312, %v1311
      %v1326 = vpack.c.b16 %v1314, %v1313
      %v1327 = vpack.c.b16 %v1316, %v1315
      %v1328 = vpack.c.b16 %v1318, %v1317
      %v1329 = vpack.c.b16 %v1320, %v1319
      %v1330 = vpack.c.b16 %v1322, %v1321
      %1339 = vmatprep.subr.bf16.mxu0 0
      %1340 = vmatpush1.bf16.msra.mxu0 %v1330
      %1341 = vmatprep.subr.bf16.mxu0 0
      %1342 = vmatpush1.bf16.msra.mxu0 %v1329
      %1343 = vmatprep.subr.bf16.mxu0 0
      %1344 = vmatpush1.bf16.msra.mxu0 %v1328
      %1345 = vmatprep.subr.bf16.mxu0 0
      %1346 = vmatpush1.bf16.msra.mxu0 %v1327
      %1347 = vmatprep.subr.bf16.mxu0 0
      %1348 = vmatpush1.bf16.msra.mxu0 %v1326
      %1349 = vmatprep.subr.bf16.mxu0 0
      %1350 = vmatpush1.bf16.msra.mxu0 %v1325
      %1351 = vmatprep.subr.bf16.mxu0 0
      %1352 = vmatpush1.bf16.msra.mxu0 %v1324
      %1353 = vmatprep.subr.bf16.mxu0 0
      %1354 = vmatpush1.bf16.msra.mxu0 %v1323
      %1355 = vmatprep.subr.bf16.mxu0 0
      %1356 = vmatpush2.bf16.msra.mxu0 0
      %1357 = vmatprep.subr.bf16.mxu0 0
      %1358 = vmatpush2.bf16.msra.mxu0 0
      %1359 = vmatprep.subr.bf16.mxu0 0
      %1360 = vmatpush2.bf16.msra.mxu0 0
      %1361 = vmatprep.subr.bf16.mxu0 0
      %1362 = vmatpush2.bf16.msra.mxu0 0
      %1363 = vmatprep.subr.bf16.mxu0 0
      %1364 = vmatpush2.bf16.msra.mxu0 0
      %1365 = vmatprep.subr.bf16.mxu0 0
      %1366 = vmatpush2.bf16.msra.mxu0 0
      %1367 = vmatprep.subr.bf16.mxu0 0
      %1368 = vmatpush2.bf16.msra.mxu0 0
      %1369 = vmatprep.subr.bf16.mxu0 0
      %1370 = vmatpush2.bf16.msra.mxu0 0
      %1371 = vmatprep.mubr.bf16.mxu0 0
      %1372 = vmatmul.mubr.bf16.gmra.mxu0 %v1259
      %v1373 = vpop.f32.mrf.mxu0
      %v1374 = vadd.f32 0.0, %v1373
      %v1375 = vpop.f32.mrf.mxu0
      %v1376 = vpop.f32.mrf.mxu0
      %v1377 = vadd.f32 0.0, %v1376
      %v1378 = vpop.f32.mrf.mxu0
      %1379 = vmatprep.mubr.bf16.mxu0 0
      %1380 = vmatmul.mubr.bf16.gmra.mxu0 %v1260
      %v1381 = vpop.f32.mrf.mxu0
      %v1382 = vadd.f32 0.0, %v1381
      %v1383 = vpop.f32.mrf.mxu0
      %v1384 = vpop.f32.mrf.mxu0
      %v1385 = vadd.f32 0.0, %v1384
      %v1386 = vpop.f32.mrf.mxu0
      %1387 = vmatprep.mubr.bf16.mxu0 0
      %1388 = vmatmul.mubr.bf16.gmra.mxu0 %v1261
      %v1389 = vpop.f32.mrf.mxu0
      %v1390 = vadd.f32 0.0, %v1389
      %v1391 = vpop.f32.mrf.mxu0
      %v1392 = vpop.f32.mrf.mxu0
      %v1393 = vadd.f32 0.0, %v1392
      %v1394 = vpop.f32.mrf.mxu0
      %1395 = vmatprep.mubr.bf16.mxu0 0
      %1396 = vmatmul.mubr.bf16.gmra.mxu0 %v1262
      %v1397 = vpop.f32.mrf.mxu0
      %v1398 = vadd.f32 0.0, %v1397
      %v1399 = vpop.f32.mrf.mxu0
      %v1400 = vpop.f32.mrf.mxu0
      %v1401 = vadd.f32 0.0, %v1400
      %v1402 = vpop.f32.mrf.mxu0
      %1403 = vmatprep.mubr.bf16.mxu0 0
      %1404 = vmatmul.mubr.bf16.gmra.mxu0 %v1263
      %v1405 = vpop.f32.mrf.mxu0
      %v1406 = vadd.f32 0.0, %v1405
      %v1407 = vpop.f32.mrf.mxu0
      %v1408 = vpop.f32.mrf.mxu0
      %v1409 = vadd.f32 0.0, %v1408
      %v1410 = vpop.f32.mrf.mxu0
      %1411 = vmatprep.mubr.bf16.mxu0 0
      %1412 = vmatmul.mubr.bf16.gmra.mxu0 %v1264
      %v1413 = vpop.f32.mrf.mxu0
      %v1414 = vadd.f32 0.0, %v1413
      %v1415 = vpop.f32.mrf.mxu0
      %v1416 = vpop.f32.mrf.mxu0
      %v1417 = vadd.f32 0.0, %v1416
      %v1418 = vpop.f32.mrf.mxu0
      %1419 = vmatprep.mubr.bf16.mxu0 0
      %1420 = vmatmul.mubr.bf16.gmra.mxu0 %v1265
      %v1421 = vpop.f32.mrf.mxu0
      %v1422 = vadd.f32 0.0, %v1421
      %v1423 = vpop.f32.mrf.mxu0
      %v1424 = vpop.f32.mrf.mxu0
      %v1425 = vadd.f32 0.0, %v1424
      %v1426 = vpop.f32.mrf.mxu0
      %1427 = vmatprep.mubr.bf16.mxu0 0
      %1428 = vmatmul.mubr.bf16.gmra.mxu0 %v1266
      %v1429 = vpop.f32.mrf.mxu0
      %v1430 = vadd.f32 0.0, %v1429
      %v1431 = vpop.f32.mrf.mxu0
      %v1432 = vpop.f32.mrf.mxu0
      %v1433 = vadd.f32 0.0, %v1432
      %v1434 = vpop.f32.mrf.mxu0
      %1435 = vmatprep.mubr.bf16.mxu0 0
      %1436 = vmatmul.mubr.bf16.gmra.mxu0 %v1267
      %v1437 = vpop.f32.mrf.mxu0
      %v1438 = vadd.f32 0.0, %v1437
      %v1439 = vpop.f32.mrf.mxu0
      %v1440 = vpop.f32.mrf.mxu0
      %v1441 = vadd.f32 0.0, %v1440
      %v1442 = vpop.f32.mrf.mxu0
      %1443 = vmatprep.mubr.bf16.mxu0 0
      %1444 = vmatmul.mubr.bf16.gmra.mxu0 %v1268
      %v1445 = vpop.f32.mrf.mxu0
      %v1446 = vadd.f32 0.0, %v1445
      %v1447 = vpop.f32.mrf.mxu0
      %v1448 = vpop.f32.mrf.mxu0
      %v1449 = vadd.f32 0.0, %v1448
      %v1450 = vpop.f32.mrf.mxu0
      %1451 = vmatprep.mubr.bf16.mxu0 0
      %1452 = vmatmul.mubr.bf16.gmra.mxu0 %v1269
      %v1453 = vpop.f32.mrf.mxu0
      %v1454 = vadd.f32 0.0, %v1453
      %v1455 = vpop.f32.mrf.mxu0
      %v1456 = vpop.f32.mrf.mxu0
      %v1457 = vadd.f32 0.0, %v1456
      %v1458 = vpop.f32.mrf.mxu0
      %1459 = vmatprep.mubr.bf16.mxu0 0
      %1460 = vmatmul.mubr.bf16.gmra.mxu0 %v1270
      %v1461 = vpop.f32.mrf.mxu0
      %v1462 = vadd.f32 0.0, %v1461
      %v1463 = vpop.f32.mrf.mxu0
      %v1464 = vpop.f32.mrf.mxu0
      %v1465 = vadd.f32 0.0, %v1464
      %v1466 = vpop.f32.mrf.mxu0
      %1467 = vmatprep.mubr.bf16.mxu0 0
      %1468 = vmatmul.mubr.bf16.gmra.mxu0 %v1271
      %v1469 = vpop.f32.mrf.mxu0
      %v1470 = vadd.f32 0.0, %v1469
      %v1471 = vpop.f32.mrf.mxu0
      %v1472 = vpop.f32.mrf.mxu0
      %v1473 = vadd.f32 0.0, %v1472
      %v1474 = vpop.f32.mrf.mxu0
      %1475 = vmatprep.mubr.bf16.mxu0 0
      %1476 = vmatmul.mubr.bf16.gmra.mxu0 %v1272
      %v1477 = vpop.f32.mrf.mxu0
      %v1478 = vadd.f32 0.0, %v1477
      %v1479 = vpop.f32.mrf.mxu0
      %v1480 = vpop.f32.mrf.mxu0
      %v1481 = vadd.f32 0.0, %v1480
      %v1482 = vpop.f32.mrf.mxu0
      %1483 = vmatprep.mubr.bf16.mxu0 0
      %1484 = vmatmul.mubr.bf16.gmra.mxu0 %v1273
      %v1485 = vpop.f32.mrf.mxu0
      %v1486 = vadd.f32 0.0, %v1485
      %v1487 = vpop.f32.mrf.mxu0
      %v1488 = vpop.f32.mrf.mxu0
      %v1489 = vadd.f32 0.0, %v1488
      %v1490 = vpop.f32.mrf.mxu0
      %1491 = vmatprep.mubr.bf16.mxu0 0
      %1492 = vmatmul.mubr.bf16.gmra.mxu0 %v1274
      %v1493 = vpop.f32.mrf.mxu0
      %v1494 = vadd.f32 0.0, %v1493
      %v1495 = vpop.f32.mrf.mxu0
      %v1496 = vpop.f32.mrf.mxu0
      %v1497 = vadd.f32 0.0, %v1496
      %v1498 = vpop.f32.mrf.mxu0
      %1499 = vdwg.mxu0
      %v1500 = vpack.c.bf16 %v1377, %v1374
      %v1501 = vpack.c.bf16 %v1385, %v1382
      %v1502 = vpack.c.bf16 %v1393, %v1390
      %v1503 = vpack.c.bf16 %v1401, %v1398
      %v1504 = vpack.c.bf16 %v1409, %v1406
      %v1505 = vpack.c.bf16 %v1417, %v1414
      %v1506 = vpack.c.bf16 %v1425, %v1422
      %v1507 = vpack.c.bf16 %v1433, %v1430
      %v1508 = vpack.c.bf16 %v1441, %v1438
      %v1509 = vpack.c.bf16 %v1449, %v1446
      %v1510 = vpack.c.bf16 %v1457, %v1454
      %v1511 = vpack.c.bf16 %v1465, %v1462
      %v1512 = vpack.c.bf16 %v1473, %v1470
      %v1513 = vpack.c.bf16 %v1481, %v1478
      %v1514 = vpack.c.bf16 %v1489, %v1486
      %v1515 = vpack.c.bf16 %v1497, %v1494
      %v1532 = vunpack.c.l.b16 %v1500
      %v1533 = vunpack.c.h.b16 %v1500
      %v1534 = vunpack.c.l.b16 %v1501
      %v1535 = vunpack.c.h.b16 %v1501
      %v1536 = vunpack.c.l.b16 %v1502
      %v1537 = vunpack.c.h.b16 %v1502
      %v1538 = vunpack.c.l.b16 %v1503
      %v1539 = vunpack.c.h.b16 %v1503
      %v1540 = vunpack.c.l.b16 %v1504
      %v1541 = vunpack.c.h.b16 %v1504
      %v1542 = vunpack.c.l.b16 %v1505
      %v1543 = vunpack.c.h.b16 %v1505
      %v1544 = vunpack.c.l.b16 %v1506
      %v1545 = vunpack.c.h.b16 %v1506
      %v1546 = vunpack.c.l.b16 %v1507
      %v1547 = vunpack.c.h.b16 %v1507
      %v1548 = vunpack.c.l.b16 %v1508
      %v1549 = vunpack.c.h.b16 %v1508
      %v1550 = vunpack.c.l.b16 %v1509
      %v1551 = vunpack.c.h.b16 %v1509
      %v1552 = vunpack.c.l.b16 %v1510
      %v1553 = vunpack.c.h.b16 %v1510
      %v1554 = vunpack.c.l.b16 %v1511
      %v1555 = vunpack.c.h.b16 %v1511
      %v1556 = vunpack.c.l.b16 %v1512
      %v1557 = vunpack.c.h.b16 %v1512
      %v1558 = vunpack.c.l.b16 %v1513
      %v1559 = vunpack.c.h.b16 %v1513
      %v1560 = vunpack.c.l.b16 %v1514
      %v1561 = vunpack.c.h.b16 %v1514
      %v1562 = vunpack.c.l.b16 %v1515
      %v1563 = vunpack.c.h.b16 %v1515
      %v1564 = vpack.c.b16 %v1532, %v1532
      %v1565 = vpack.c.b16 %v1533, %v1533
      %v1566 = vpack.c.b16 %v1534, %v1534
      %v1567 = vpack.c.b16 %v1535, %v1535
      %v1568 = vpack.c.b16 %v1536, %v1536
      %v1569 = vpack.c.b16 %v1537, %v1537
      %v1570 = vpack.c.b16 %v1538, %v1538
      %v1571 = vpack.c.b16 %v1539, %v1539
      %v1572 = vpack.c.b16 %v1540, %v1540
      %v1573 = vpack.c.b16 %v1541, %v1541
      %v1574 = vpack.c.b16 %v1542, %v1542
      %v1575 = vpack.c.b16 %v1543, %v1543
      %v1576 = vpack.c.b16 %v1544, %v1544
      %v1577 = vpack.c.b16 %v1545, %v1545
      %v1578 = vpack.c.b16 %v1546, %v1546
      %v1579 = vpack.c.b16 %v1547, %v1547
      %v1580 = vpack.c.b16 %v1548, %v1548
      %v1581 = vpack.c.b16 %v1549, %v1549
      %v1582 = vpack.c.b16 %v1550, %v1550
      %v1583 = vpack.c.b16 %v1551, %v1551
      %v1584 = vpack.c.b16 %v1552, %v1552
      %v1585 = vpack.c.b16 %v1553, %v1553
      %v1586 = vpack.c.b16 %v1554, %v1554
      %v1587 = vpack.c.b16 %v1555, %v1555
      %v1588 = vpack.c.b16 %v1556, %v1556
      %v1589 = vpack.c.b16 %v1557, %v1557
      %v1590 = vpack.c.b16 %v1558, %v1558
      %v1591 = vpack.c.b16 %v1559, %v1559
      %v1592 = vpack.c.b16 %v1560, %v1560
      %v1593 = vpack.c.b16 %v1561, %v1561
      %v1594 = vpack.c.b16 %v1562, %v1562
      %v1595 = vpack.c.b16 %v1563, %v1563
      %s1628 = scalar_lea.vmem %s177, 128
      %1629 = vst [vmem:[%s1628] sm:$0xf] %v1564
      %1630 = vst [vmem:[%s1628 + $0x4] sm:$0xf] %v1565
      %1631 = vst [vmem:[%s1628 + $0x8] sm:$0xf] %v1566
      %1632 = vst [vmem:[%s1628 + $0xc] sm:$0xf] %v1567
      %1633 = vst [vmem:[%s1628 + $0x10] sm:$0xf] %v1568
      %1634 = vst [vmem:[%s1628 + $0x14] sm:$0xf] %v1569
      %1635 = vst [vmem:[%s1628 + $0x18] sm:$0xf] %v1570
      %1636 = vst [vmem:[%s1628 + $0x1c] sm:$0xf] %v1571
      %1637 = vst [vmem:[%s1628 + $0x20] sm:$0xf] %v1572
      %1638 = vst [vmem:[%s1628 + $0x24] sm:$0xf] %v1573
      %1639 = vst [vmem:[%s1628 + $0x28] sm:$0xf] %v1574
      %1640 = vst [vmem:[%s1628 + $0x2c] sm:$0xf] %v1575
      %1641 = vst [vmem:[%s1628 + $0x30] sm:$0xf] %v1576
      %1642 = vst [vmem:[%s1628 + $0x34] sm:$0xf] %v1577
      %1643 = vst [vmem:[%s1628 + $0x38] sm:$0xf] %v1578
      %1644 = vst [vmem:[%s1628 + $0x3c] sm:$0xf] %v1579
      %1645 = vst [vmem:[%s1628 + $0x40] sm:$0xf] %v1580
      %1646 = vst [vmem:[%s1628 + $0x44] sm:$0xf] %v1581
      %1647 = vst [vmem:[%s1628 + $0x48] sm:$0xf] %v1582
      %1648 = vst [vmem:[%s1628 + $0x4c] sm:$0xf] %v1583
      %1649 = vst [vmem:[%s1628 + $0x50] sm:$0xf] %v1584
      %1650 = vst [vmem:[%s1628 + $0x54] sm:$0xf] %v1585
      %1651 = vst [vmem:[%s1628 + $0x58] sm:$0xf] %v1586
      %1652 = vst [vmem:[%s1628 + $0x5c] sm:$0xf] %v1587
      %1653 = vst [vmem:[%s1628 + $0x60] sm:$0xf] %v1588
      %1654 = vst [vmem:[%s1628 + $0x64] sm:$0xf] %v1589
      %1655 = vst [vmem:[%s1628 + $0x68] sm:$0xf] %v1590
      %1656 = vst [vmem:[%s1628 + $0x6c] sm:$0xf] %v1591
      %1657 = vst [vmem:[%s1628 + $0x70] sm:$0xf] %v1592
      %1658 = vst [vmem:[%s1628 + $0x74] sm:$0xf] %v1593
      %1659 = vst [vmem:[%s1628 + $0x78] sm:$0xf] %v1594
      %1660 = vst [vmem:[%s1628 + $0x7c] sm:$0xf] %v1595
      %v1661 = vadd.f32 %v1374, %v1377
      %v1662 = vadd.f32 %v1661, %v1382
      %v1663 = vadd.f32 %v1662, %v1385
      %v1664 = vadd.f32 %v1663, %v1390
      %v1665 = vadd.f32 %v1664, %v1393
      %v1666 = vadd.f32 %v1665, %v1398
      %v1667 = vadd.f32 %v1666, %v1401
      %v1668 = vadd.f32 %v1667, %v1406
      %v1669 = vadd.f32 %v1668, %v1409
      %v1670 = vadd.f32 %v1669, %v1414
      %v1671 = vadd.f32 %v1670, %v1417
      %v1672 = vadd.f32 %v1671, %v1422
      %v1673 = vadd.f32 %v1672, %v1425
      %v1674 = vadd.f32 %v1673, %v1430
      %v1675 = vadd.f32 %v1674, %v1433
      %v1676 = vadd.f32 %v1675, %v1438
      %v1677 = vadd.f32 %v1676, %v1441
      %v1678 = vadd.f32 %v1677, %v1446
      %v1679 = vadd.f32 %v1678, %v1449
      %v1680 = vadd.f32 %v1679, %v1454
      %v1681 = vadd.f32 %v1680, %v1457
      %v1682 = vadd.f32 %v1681, %v1462
      %v1683 = vadd.f32 %v1682, %v1465
      %v1684 = vadd.f32 %v1683, %v1470
      %v1685 = vadd.f32 %v1684, %v1473
      %v1686 = vadd.f32 %v1685, %v1478
      %v1687 = vadd.f32 %v1686, %v1481
      %v1688 = vadd.f32 %v1687, %v1486
      %v1689 = vadd.f32 %v1688, %v1489
      %v1690 = vadd.f32 %v1689, %v1494
      %v1691 = vadd.f32 %v1690, %v1497
      %v1692 = vrot.slane %v1691, 4
      %v1693 = vadd.f32 %v1691, %v1692
      %v1694 = vrot.slane %v1693, 2
      %v1695 = vadd.f32 %v1693, %v1694
      %v1696 = vrot.slane %v1695, 1
      %v1697 = vadd.f32 %v1695, %v1696
      %v1698 = vadd.f32 %v752, %v1697
      %v1699 = vmul.f32 %v1374, %v1374
      %v1700 = vmul.f32 %v1377, %v1377
      %v1701 = vmul.f32 %v1382, %v1382
      %v1702 = vmul.f32 %v1385, %v1385
      %v1703 = vmul.f32 %v1390, %v1390
      %v1704 = vmul.f32 %v1393, %v1393
      %v1705 = vmul.f32 %v1398, %v1398
      %v1706 = vmul.f32 %v1401, %v1401
      %v1707 = vmul.f32 %v1406, %v1406
      %v1708 = vmul.f32 %v1409, %v1409
      %v1709 = vmul.f32 %v1414, %v1414
      %v1710 = vmul.f32 %v1417, %v1417
      %v1711 = vmul.f32 %v1422, %v1422
      %v1712 = vmul.f32 %v1425, %v1425
      %v1713 = vmul.f32 %v1430, %v1430
      %v1714 = vmul.f32 %v1433, %v1433
      %v1715 = vmul.f32 %v1438, %v1438
      %v1716 = vmul.f32 %v1441, %v1441
      %v1717 = vmul.f32 %v1446, %v1446
      %v1718 = vmul.f32 %v1449, %v1449
      %v1719 = vmul.f32 %v1454, %v1454
      %v1720 = vmul.f32 %v1457, %v1457
      %v1721 = vmul.f32 %v1462, %v1462
      %v1722 = vmul.f32 %v1465, %v1465
      %v1723 = vmul.f32 %v1470, %v1470
      %v1724 = vmul.f32 %v1473, %v1473
      %v1725 = vmul.f32 %v1478, %v1478
      %v1726 = vmul.f32 %v1481, %v1481
      %v1727 = vmul.f32 %v1486, %v1486
      %v1728 = vmul.f32 %v1489, %v1489
      %v1729 = vmul.f32 %v1494, %v1494
      %v1730 = vmul.f32 %v1497, %v1497
      %v1731 = vadd.f32 %v1699, %v1700
      %v1732 = vadd.f32 %v1731, %v1701
      %v1733 = vadd.f32 %v1732, %v1702
      %v1734 = vadd.f32 %v1733, %v1703
      %v1735 = vadd.f32 %v1734, %v1704
      %v1736 = vadd.f32 %v1735, %v1705
      %v1737 = vadd.f32 %v1736, %v1706
      %v1738 = vadd.f32 %v1737, %v1707
      %v1739 = vadd.f32 %v1738, %v1708
      %v1740 = vadd.f32 %v1739, %v1709
      %v1741 = vadd.f32 %v1740, %v1710
      %v1742 = vadd.f32 %v1741, %v1711
      %v1743 = vadd.f32 %v1742, %v1712
      %v1744 = vadd.f32 %v1743, %v1713
      %v1745 = vadd.f32 %v1744, %v1714
      %v1746 = vadd.f32 %v1745, %v1715
      %v1747 = vadd.f32 %v1746, %v1716
      %v1748 = vadd.f32 %v1747, %v1717
      %v1749 = vadd.f32 %v1748, %v1718
      %v1750 = vadd.f32 %v1749, %v1719
      %v1751 = vadd.f32 %v1750, %v1720
      %v1752 = vadd.f32 %v1751, %v1721
      %v1753 = vadd.f32 %v1752, %v1722
      %v1754 = vadd.f32 %v1753, %v1723
      %v1755 = vadd.f32 %v1754, %v1724
      %v1756 = vadd.f32 %v1755, %v1725
      %v1757 = vadd.f32 %v1756, %v1726
      %v1758 = vadd.f32 %v1757, %v1727
      %v1759 = vadd.f32 %v1758, %v1728
      %v1760 = vadd.f32 %v1759, %v1729
      %v1761 = vadd.f32 %v1760, %v1730
      %v1762 = vrot.slane %v1761, 4
      %v1763 = vadd.f32 %v1761, %v1762
      %v1764 = vrot.slane %v1763, 2
      %v1765 = vadd.f32 %v1763, %v1764
      %v1766 = vrot.slane %v1765, 1
      %v1767 = vadd.f32 %v1765, %v1766
      %v1768 = vadd.f32 %v822, %v1767
      %s1769 = scalar_lea.vmem %s1, 128
      %v1770 = vld [vmem:[%s1769] sm:$0xf]
      %v1771 = vld [vmem:[%s1769 + $0x4] sm:$0xf]
      %v1772 = vld [vmem:[%s1769 + $0x8] sm:$0xf]
      %v1773 = vld [vmem:[%s1769 + $0xc] sm:$0xf]
      %v1774 = vld [vmem:[%s1769 + $0x10] sm:$0xf]
      %v1775 = vld [vmem:[%s1769 + $0x14] sm:$0xf]
      %v1776 = vld [vmem:[%s1769 + $0x18] sm:$0xf]
      %v1777 = vld [vmem:[%s1769 + $0x1c] sm:$0xf]
      %v1778 = vld [vmem:[%s1769 + $0x20] sm:$0xf]
      %v1779 = vld [vmem:[%s1769 + $0x24] sm:$0xf]
      %v1780 = vld [vmem:[%s1769 + $0x28] sm:$0xf]
      %v1781 = vld [vmem:[%s1769 + $0x2c] sm:$0xf]
      %v1782 = vld [vmem:[%s1769 + $0x30] sm:$0xf]
      %v1783 = vld [vmem:[%s1769 + $0x34] sm:$0xf]
      %v1784 = vld [vmem:[%s1769 + $0x38] sm:$0xf]
      %v1785 = vld [vmem:[%s1769 + $0x3c] sm:$0xf]
      %v1788 = vunpack.c.l.b16 %v231
      %v1789 = vunpack.c.l.b16 %v232
      %v1790 = vpack.c.b16 %v1789, %v1788
      %v1808 = vunpack.c.l.b16 %v1770
      %v1809 = vunpack.c.l.b16 %v1771
      %v1810 = vunpack.c.l.b16 %v1772
      %v1811 = vunpack.c.l.b16 %v1773
      %v1812 = vunpack.c.l.b16 %v1774
      %v1813 = vunpack.c.l.b16 %v1775
      %v1814 = vunpack.c.l.b16 %v1776
      %v1815 = vunpack.c.l.b16 %v1777
      %v1816 = vunpack.c.l.b16 %v1778
      %v1817 = vunpack.c.l.b16 %v1779
      %v1818 = vunpack.c.l.b16 %v1780
      %v1819 = vunpack.c.l.b16 %v1781
      %v1820 = vunpack.c.l.b16 %v1782
      %v1821 = vunpack.c.l.b16 %v1783
      %v1822 = vunpack.c.l.b16 %v1784
      %v1823 = vunpack.c.l.b16 %v1785
      %v1824 = vpack.c.b16 %v1809, %v1808
      %v1825 = vpack.c.b16 %v1811, %v1810
      %v1826 = vpack.c.b16 %v1813, %v1812
      %v1827 = vpack.c.b16 %v1815, %v1814
      %v1828 = vpack.c.b16 %v1817, %v1816
      %v1829 = vpack.c.b16 %v1819, %v1818
      %v1830 = vpack.c.b16 %v1821, %v1820
      %v1831 = vpack.c.b16 %v1823, %v1822
      %1840 = vmatprep.subr.bf16.mxu0 0
      %1841 = vmatpush1.bf16.msra.mxu0 %v1831
      %1842 = vmatprep.subr.bf16.mxu0 0
      %1843 = vmatpush1.bf16.msra.mxu0 %v1830
      %1844 = vmatprep.subr.bf16.mxu0 0
      %1845 = vmatpush1.bf16.msra.mxu0 %v1829
      %1846 = vmatprep.subr.bf16.mxu0 0
      %1847 = vmatpush1.bf16.msra.mxu0 %v1828
      %1848 = vmatprep.subr.bf16.mxu0 0
      %1849 = vmatpush1.bf16.msra.mxu0 %v1827
      %1850 = vmatprep.subr.bf16.mxu0 0
      %1851 = vmatpush1.bf16.msra.mxu0 %v1826
      %1852 = vmatprep.subr.bf16.mxu0 0
      %1853 = vmatpush1.bf16.msra.mxu0 %v1825
      %1854 = vmatprep.subr.bf16.mxu0 0
      %1855 = vmatpush1.bf16.msra.mxu0 %v1824
      %1856 = vmatprep.subr.bf16.mxu0 0
      %1857 = vmatpush2.bf16.msra.mxu0 0
      %1858 = vmatprep.subr.bf16.mxu0 0
      %1859 = vmatpush2.bf16.msra.mxu0 0
      %1860 = vmatprep.subr.bf16.mxu0 0
      %1861 = vmatpush2.bf16.msra.mxu0 0
      %1862 = vmatprep.subr.bf16.mxu0 0
      %1863 = vmatpush2.bf16.msra.mxu0 0
      %1864 = vmatprep.subr.bf16.mxu0 0
      %1865 = vmatpush2.bf16.msra.mxu0 0
      %1866 = vmatprep.subr.bf16.mxu0 0
      %1867 = vmatpush2.bf16.msra.mxu0 0
      %1868 = vmatprep.subr.bf16.mxu0 0
      %1869 = vmatpush2.bf16.msra.mxu0 0
      %1870 = vmatprep.subr.bf16.mxu0 0
      %1871 = vmatpush2.bf16.msra.mxu0 0
      %1872 = vmatprep.mubr.bf16.mxu0 0
      %1873 = vmatmul.mubr.bf16.gmra.mxu0 %v315
      %v1874 = vpop.f32.mrf.mxu0
      %v1875 = vadd.f32 0.0, %v1874
      %v1876 = vpop.f32.mrf.mxu0
      %v1877 = vpop.f32.mrf.mxu0
      %v1878 = vadd.f32 0.0, %v1877
      %v1879 = vpop.f32.mrf.mxu0
      %1880 = vmatprep.mubr.bf16.mxu0 0
      %1881 = vmatmul.mubr.bf16.gmra.mxu0 %v316
      %v1882 = vpop.f32.mrf.mxu0
      %v1883 = vadd.f32 0.0, %v1882
      %v1884 = vpop.f32.mrf.mxu0
      %v1885 = vpop.f32.mrf.mxu0
      %v1886 = vadd.f32 0.0, %v1885
      %v1887 = vpop.f32.mrf.mxu0
      %1888 = vmatprep.mubr.bf16.mxu0 0
      %1889 = vmatmul.mubr.bf16.gmra.mxu0 %v317
      %v1890 = vpop.f32.mrf.mxu0
      %v1891 = vadd.f32 0.0, %v1890
      %v1892 = vpop.f32.mrf.mxu0
      %v1893 = vpop.f32.mrf.mxu0
      %v1894 = vadd.f32 0.0, %v1893
      %v1895 = vpop.f32.mrf.mxu0
      %1896 = vmatprep.mubr.bf16.mxu0 0
      %1897 = vmatmul.mubr.bf16.gmra.mxu0 %v318
      %v1898 = vpop.f32.mrf.mxu0
      %v1899 = vadd.f32 0.0, %v1898
      %v1900 = vpop.f32.mrf.mxu0
      %v1901 = vpop.f32.mrf.mxu0
      %v1902 = vadd.f32 0.0, %v1901
      %v1903 = vpop.f32.mrf.mxu0
      %1904 = vmatprep.mubr.bf16.mxu0 0
      %1905 = vmatmul.mubr.bf16.gmra.mxu0 %v319
      %v1906 = vpop.f32.mrf.mxu0
      %v1907 = vadd.f32 0.0, %v1906
      %v1908 = vpop.f32.mrf.mxu0
      %v1909 = vpop.f32.mrf.mxu0
      %v1910 = vadd.f32 0.0, %v1909
      %v1911 = vpop.f32.mrf.mxu0
      %1912 = vmatprep.mubr.bf16.mxu0 0
      %1913 = vmatmul.mubr.bf16.gmra.mxu0 %v320
      %v1914 = vpop.f32.mrf.mxu0
      %v1915 = vadd.f32 0.0, %v1914
      %v1916 = vpop.f32.mrf.mxu0
      %v1917 = vpop.f32.mrf.mxu0
      %v1918 = vadd.f32 0.0, %v1917
      %v1919 = vpop.f32.mrf.mxu0
      %1920 = vmatprep.mubr.bf16.mxu0 0
      %1921 = vmatmul.mubr.bf16.gmra.mxu0 %v321
      %v1922 = vpop.f32.mrf.mxu0
      %v1923 = vadd.f32 0.0, %v1922
      %v1924 = vpop.f32.mrf.mxu0
      %v1925 = vpop.f32.mrf.mxu0
      %v1926 = vadd.f32 0.0, %v1925
      %v1927 = vpop.f32.mrf.mxu0
      %1928 = vmatprep.mubr.bf16.mxu0 0
      %1929 = vmatmul.mubr.bf16.gmra.mxu0 %v322
      %v1930 = vpop.f32.mrf.mxu0
      %v1931 = vadd.f32 0.0, %v1930
      %v1932 = vpop.f32.mrf.mxu0
      %v1933 = vpop.f32.mrf.mxu0
      %v1934 = vadd.f32 0.0, %v1933
      %v1935 = vpop.f32.mrf.mxu0
      %1936 = vmatprep.mubr.bf16.mxu0 0
      %1937 = vmatmul.mubr.bf16.gmra.mxu0 %v323
      %v1938 = vpop.f32.mrf.mxu0
      %v1939 = vadd.f32 0.0, %v1938
      %v1940 = vpop.f32.mrf.mxu0
      %v1941 = vpop.f32.mrf.mxu0
      %v1942 = vadd.f32 0.0, %v1941
      %v1943 = vpop.f32.mrf.mxu0
      %1944 = vmatprep.mubr.bf16.mxu0 0
      %1945 = vmatmul.mubr.bf16.gmra.mxu0 %v324
      %v1946 = vpop.f32.mrf.mxu0
      %v1947 = vadd.f32 0.0, %v1946
      %v1948 = vpop.f32.mrf.mxu0
      %v1949 = vpop.f32.mrf.mxu0
      %v1950 = vadd.f32 0.0, %v1949
      %v1951 = vpop.f32.mrf.mxu0
      %1952 = vmatprep.mubr.bf16.mxu0 0
      %1953 = vmatmul.mubr.bf16.gmra.mxu0 %v325
      %v1954 = vpop.f32.mrf.mxu0
      %v1955 = vadd.f32 0.0, %v1954
      %v1956 = vpop.f32.mrf.mxu0
      %v1957 = vpop.f32.mrf.mxu0
      %v1958 = vadd.f32 0.0, %v1957
      %v1959 = vpop.f32.mrf.mxu0
      %1960 = vmatprep.mubr.bf16.mxu0 0
      %1961 = vmatmul.mubr.bf16.gmra.mxu0 %v326
      %v1962 = vpop.f32.mrf.mxu0
      %v1963 = vadd.f32 0.0, %v1962
      %v1964 = vpop.f32.mrf.mxu0
      %v1965 = vpop.f32.mrf.mxu0
      %v1966 = vadd.f32 0.0, %v1965
      %v1967 = vpop.f32.mrf.mxu0
      %1968 = vmatprep.mubr.bf16.mxu0 0
      %1969 = vmatmul.mubr.bf16.gmra.mxu0 %v327
      %v1970 = vpop.f32.mrf.mxu0
      %v1971 = vadd.f32 0.0, %v1970
      %v1972 = vpop.f32.mrf.mxu0
      %v1973 = vpop.f32.mrf.mxu0
      %v1974 = vadd.f32 0.0, %v1973
      %v1975 = vpop.f32.mrf.mxu0
      %1976 = vmatprep.mubr.bf16.mxu0 0
      %1977 = vmatmul.mubr.bf16.gmra.mxu0 %v328
      %v1978 = vpop.f32.mrf.mxu0
      %v1979 = vadd.f32 0.0, %v1978
      %v1980 = vpop.f32.mrf.mxu0
      %v1981 = vpop.f32.mrf.mxu0
      %v1982 = vadd.f32 0.0, %v1981
      %v1983 = vpop.f32.mrf.mxu0
      %1984 = vmatprep.mubr.bf16.mxu0 0
      %1985 = vmatmul.mubr.bf16.gmra.mxu0 %v329
      %v1986 = vpop.f32.mrf.mxu0
      %v1987 = vadd.f32 0.0, %v1986
      %v1988 = vpop.f32.mrf.mxu0
      %v1989 = vpop.f32.mrf.mxu0
      %v1990 = vadd.f32 0.0, %v1989
      %v1991 = vpop.f32.mrf.mxu0
      %1992 = vmatprep.mubr.bf16.mxu0 0
      %1993 = vmatmul.mubr.bf16.gmra.mxu0 %v1790
      %v1994 = vpop.f32.mrf.mxu0
      %v1995 = vadd.f32 0.0, %v1994
      %v1996 = vpop.f32.mrf.mxu0
      %v1997 = vpop.f32.mrf.mxu0
      %v1998 = vadd.f32 0.0, %v1997
      %v1999 = vpop.f32.mrf.mxu0
      %2000 = vdwg.mxu0
      %v2001 = vpack.c.bf16 %v1878, %v1875
      %v2002 = vpack.c.bf16 %v1886, %v1883
      %v2003 = vpack.c.bf16 %v1894, %v1891
      %v2004 = vpack.c.bf16 %v1902, %v1899
      %v2005 = vpack.c.bf16 %v1910, %v1907
      %v2006 = vpack.c.bf16 %v1918, %v1915
      %v2007 = vpack.c.bf16 %v1926, %v1923
      %v2008 = vpack.c.bf16 %v1934, %v1931
      %v2009 = vpack.c.bf16 %v1942, %v1939
      %v2010 = vpack.c.bf16 %v1950, %v1947
      %v2011 = vpack.c.bf16 %v1958, %v1955
      %v2012 = vpack.c.bf16 %v1966, %v1963
      %v2013 = vpack.c.bf16 %v1974, %v1971
      %v2014 = vpack.c.bf16 %v1982, %v1979
      %v2015 = vpack.c.bf16 %v1990, %v1987
      %v2016 = vpack.c.bf16 %v1998, %v1995
      %v2033 = vunpack.c.l.b16 %v2001
      %v2034 = vunpack.c.h.b16 %v2001
      %v2035 = vunpack.c.l.b16 %v2002
      %v2036 = vunpack.c.h.b16 %v2002
      %v2037 = vunpack.c.l.b16 %v2003
      %v2038 = vunpack.c.h.b16 %v2003
      %v2039 = vunpack.c.l.b16 %v2004
      %v2040 = vunpack.c.h.b16 %v2004
      %v2041 = vunpack.c.l.b16 %v2005
      %v2042 = vunpack.c.h.b16 %v2005
      %v2043 = vunpack.c.l.b16 %v2006
      %v2044 = vunpack.c.h.b16 %v2006
      %v2045 = vunpack.c.l.b16 %v2007
      %v2046 = vunpack.c.h.b16 %v2007
      %v2047 = vunpack.c.l.b16 %v2008
      %v2048 = vunpack.c.h.b16 %v2008
      %v2049 = vunpack.c.l.b16 %v2009
      %v2050 = vunpack.c.h.b16 %v2009
      %v2051 = vunpack.c.l.b16 %v2010
      %v2052 = vunpack.c.h.b16 %v2010
      %v2053 = vunpack.c.l.b16 %v2011
      %v2054 = vunpack.c.h.b16 %v2011
      %v2055 = vunpack.c.l.b16 %v2012
      %v2056 = vunpack.c.h.b16 %v2012
      %v2057 = vunpack.c.l.b16 %v2013
      %v2058 = vunpack.c.h.b16 %v2013
      %v2059 = vunpack.c.l.b16 %v2014
      %v2060 = vunpack.c.h.b16 %v2014
      %v2061 = vunpack.c.l.b16 %v2015
      %v2062 = vunpack.c.h.b16 %v2015
      %v2063 = vunpack.c.l.b16 %v2016
      %v2064 = vunpack.c.h.b16 %v2016
      %v2065 = vpack.c.b16 %v2033, %v2033
      %v2066 = vpack.c.b16 %v2034, %v2034
      %v2067 = vpack.c.b16 %v2035, %v2035
      %v2068 = vpack.c.b16 %v2036, %v2036
      %v2069 = vpack.c.b16 %v2037, %v2037
      %v2070 = vpack.c.b16 %v2038, %v2038
      %v2071 = vpack.c.b16 %v2039, %v2039
      %v2072 = vpack.c.b16 %v2040, %v2040
      %v2073 = vpack.c.b16 %v2041, %v2041
      %v2074 = vpack.c.b16 %v2042, %v2042
      %v2075 = vpack.c.b16 %v2043, %v2043
      %v2076 = vpack.c.b16 %v2044, %v2044
      %v2077 = vpack.c.b16 %v2045, %v2045
      %v2078 = vpack.c.b16 %v2046, %v2046
      %v2079 = vpack.c.b16 %v2047, %v2047
      %v2080 = vpack.c.b16 %v2048, %v2048
      %v2081 = vpack.c.b16 %v2049, %v2049
      %v2082 = vpack.c.b16 %v2050, %v2050
      %v2083 = vpack.c.b16 %v2051, %v2051
      %v2084 = vpack.c.b16 %v2052, %v2052
      %v2085 = vpack.c.b16 %v2053, %v2053
      %v2086 = vpack.c.b16 %v2054, %v2054
      %v2087 = vpack.c.b16 %v2055, %v2055
      %v2088 = vpack.c.b16 %v2056, %v2056
      %v2089 = vpack.c.b16 %v2057, %v2057
      %v2090 = vpack.c.b16 %v2058, %v2058
      %v2091 = vpack.c.b16 %v2059, %v2059
      %v2092 = vpack.c.b16 %v2060, %v2060
      %v2093 = vpack.c.b16 %v2061, %v2061
      %v2094 = vpack.c.b16 %v2062, %v2062
      %v2095 = vpack.c.b16 %v2063, %v2063
      %v2096 = vpack.c.b16 %v2064, %v2064
      %s2129 = scalar_lea.vmem %s177, 256
      %2130 = vst [vmem:[%s2129] sm:$0xf] %v2065
      %2131 = vst [vmem:[%s2129 + $0x4] sm:$0xf] %v2066
      %2132 = vst [vmem:[%s2129 + $0x8] sm:$0xf] %v2067
      %2133 = vst [vmem:[%s2129 + $0xc] sm:$0xf] %v2068
      %2134 = vst [vmem:[%s2129 + $0x10] sm:$0xf] %v2069
      %2135 = vst [vmem:[%s2129 + $0x14] sm:$0xf] %v2070
      %2136 = vst [vmem:[%s2129 + $0x18] sm:$0xf] %v2071
      %2137 = vst [vmem:[%s2129 + $0x1c] sm:$0xf] %v2072
      %2138 = vst [vmem:[%s2129 + $0x20] sm:$0xf] %v2073
      %2139 = vst [vmem:[%s2129 + $0x24] sm:$0xf] %v2074
      %2140 = vst [vmem:[%s2129 + $0x28] sm:$0xf] %v2075
      %2141 = vst [vmem:[%s2129 + $0x2c] sm:$0xf] %v2076
      %2142 = vst [vmem:[%s2129 + $0x30] sm:$0xf] %v2077
      %2143 = vst [vmem:[%s2129 + $0x34] sm:$0xf] %v2078
      %2144 = vst [vmem:[%s2129 + $0x38] sm:$0xf] %v2079
      %2145 = vst [vmem:[%s2129 + $0x3c] sm:$0xf] %v2080
      %2146 = vst [vmem:[%s2129 + $0x40] sm:$0xf] %v2081
      %2147 = vst [vmem:[%s2129 + $0x44] sm:$0xf] %v2082
      %2148 = vst [vmem:[%s2129 + $0x48] sm:$0xf] %v2083
      %2149 = vst [vmem:[%s2129 + $0x4c] sm:$0xf] %v2084
      %2150 = vst [vmem:[%s2129 + $0x50] sm:$0xf] %v2085
      %2151 = vst [vmem:[%s2129 + $0x54] sm:$0xf] %v2086
      %2152 = vst [vmem:[%s2129 + $0x58] sm:$0xf] %v2087
      %2153 = vst [vmem:[%s2129 + $0x5c] sm:$0xf] %v2088
      %2154 = vst [vmem:[%s2129 + $0x60] sm:$0xf] %v2089
      %2155 = vst [vmem:[%s2129 + $0x64] sm:$0xf] %v2090
      %2156 = vst [vmem:[%s2129 + $0x68] sm:$0xf] %v2091
      %2157 = vst [vmem:[%s2129 + $0x6c] sm:$0xf] %v2092
      %2158 = vst [vmem:[%s2129 + $0x70] sm:$0xf] %v2093
      %2159 = vst [vmem:[%s2129 + $0x74] sm:$0xf] %v2094
      %2160 = vst [vmem:[%s2129 + $0x78] sm:$0xf] %v2095
      %2161 = vst [vmem:[%s2129 + $0x7c] sm:$0xf] %v2096
      %v2162 = vadd.f32 %v1875, %v1878
      %v2163 = vadd.f32 %v2162, %v1883
      %v2164 = vadd.f32 %v2163, %v1886
      %v2165 = vadd.f32 %v2164, %v1891
      %v2166 = vadd.f32 %v2165, %v1894
      %v2167 = vadd.f32 %v2166, %v1899
      %v2168 = vadd.f32 %v2167, %v1902
      %v2169 = vadd.f32 %v2168, %v1907
      %v2170 = vadd.f32 %v2169, %v1910
      %v2171 = vadd.f32 %v2170, %v1915
      %v2172 = vadd.f32 %v2171, %v1918
      %v2173 = vadd.f32 %v2172, %v1923
      %v2174 = vadd.f32 %v2173, %v1926
      %v2175 = vadd.f32 %v2174, %v1931
      %v2176 = vadd.f32 %v2175, %v1934
      %v2177 = vadd.f32 %v2176, %v1939
      %v2178 = vadd.f32 %v2177, %v1942
      %v2179 = vadd.f32 %v2178, %v1947
      %v2180 = vadd.f32 %v2179, %v1950
      %v2181 = vadd.f32 %v2180, %v1955
      %v2182 = vadd.f32 %v2181, %v1958
      %v2183 = vadd.f32 %v2182, %v1963
      %v2184 = vadd.f32 %v2183, %v1966
      %v2185 = vadd.f32 %v2184, %v1971
      %v2186 = vadd.f32 %v2185, %v1974
      %v2187 = vadd.f32 %v2186, %v1979
      %v2188 = vadd.f32 %v2187, %v1982
      %v2189 = vadd.f32 %v2188, %v1987
      %v2190 = vadd.f32 %v2189, %v1990
      %v2191 = vadd.f32 %v2190, %v1995
      %v2192 = vadd.f32 %v2191, %v1998
      %v2193 = vrot.slane %v2192, 4
      %v2194 = vadd.f32 %v2192, %v2193
      %v2195 = vrot.slane %v2194, 2
      %v2196 = vadd.f32 %v2194, %v2195
      %v2197 = vrot.slane %v2196, 1
      %v2198 = vadd.f32 %v2196, %v2197
      %v2199 = vadd.f32 %v1698, %v2198
      %v2200 = vmul.f32 %v1875, %v1875
      %v2201 = vmul.f32 %v1878, %v1878
      %v2202 = vmul.f32 %v1883, %v1883
      %v2203 = vmul.f32 %v1886, %v1886
      %v2204 = vmul.f32 %v1891, %v1891
      %v2205 = vmul.f32 %v1894, %v1894
      %v2206 = vmul.f32 %v1899, %v1899
      %v2207 = vmul.f32 %v1902, %v1902
      %v2208 = vmul.f32 %v1907, %v1907
      %v2209 = vmul.f32 %v1910, %v1910
      %v2210 = vmul.f32 %v1915, %v1915
      %v2211 = vmul.f32 %v1918, %v1918
      %v2212 = vmul.f32 %v1923, %v1923
      %v2213 = vmul.f32 %v1926, %v1926
      %v2214 = vmul.f32 %v1931, %v1931
      %v2215 = vmul.f32 %v1934, %v1934
      %v2216 = vmul.f32 %v1939, %v1939
      %v2217 = vmul.f32 %v1942, %v1942
      %v2218 = vmul.f32 %v1947, %v1947
      %v2219 = vmul.f32 %v1950, %v1950
      %v2220 = vmul.f32 %v1955, %v1955
      %v2221 = vmul.f32 %v1958, %v1958
      %v2222 = vmul.f32 %v1963, %v1963
      %v2223 = vmul.f32 %v1966, %v1966
      %v2224 = vmul.f32 %v1971, %v1971
      %v2225 = vmul.f32 %v1974, %v1974
      %v2226 = vmul.f32 %v1979, %v1979
      %v2227 = vmul.f32 %v1982, %v1982
      %v2228 = vmul.f32 %v1987, %v1987
      %v2229 = vmul.f32 %v1990, %v1990
      %v2230 = vmul.f32 %v1995, %v1995
      %v2231 = vmul.f32 %v1998, %v1998
      %v2232 = vadd.f32 %v2200, %v2201
      %v2233 = vadd.f32 %v2232, %v2202
      %v2234 = vadd.f32 %v2233, %v2203
      %v2235 = vadd.f32 %v2234, %v2204
      %v2236 = vadd.f32 %v2235, %v2205
      %v2237 = vadd.f32 %v2236, %v2206
      %v2238 = vadd.f32 %v2237, %v2207
      %v2239 = vadd.f32 %v2238, %v2208
      %v2240 = vadd.f32 %v2239, %v2209
      %v2241 = vadd.f32 %v2240, %v2210
      %v2242 = vadd.f32 %v2241, %v2211
      %v2243 = vadd.f32 %v2242, %v2212
      %v2244 = vadd.f32 %v2243, %v2213
      %v2245 = vadd.f32 %v2244, %v2214
      %v2246 = vadd.f32 %v2245, %v2215
      %v2247 = vadd.f32 %v2246, %v2216
      %v2248 = vadd.f32 %v2247, %v2217
      %v2249 = vadd.f32 %v2248, %v2218
      %v2250 = vadd.f32 %v2249, %v2219
      %v2251 = vadd.f32 %v2250, %v2220
      %v2252 = vadd.f32 %v2251, %v2221
      %v2253 = vadd.f32 %v2252, %v2222
      %v2254 = vadd.f32 %v2253, %v2223
      %v2255 = vadd.f32 %v2254, %v2224
      %v2256 = vadd.f32 %v2255, %v2225
      %v2257 = vadd.f32 %v2256, %v2226
      %v2258 = vadd.f32 %v2257, %v2227
      %v2259 = vadd.f32 %v2258, %v2228
      %v2260 = vadd.f32 %v2259, %v2229
      %v2261 = vadd.f32 %v2260, %v2230
      %v2262 = vadd.f32 %v2261, %v2231
      %v2263 = vrot.slane %v2262, 4
      %v2264 = vadd.f32 %v2262, %v2263
      %v2265 = vrot.slane %v2264, 2
      %v2266 = vadd.f32 %v2264, %v2265
      %v2267 = vrot.slane %v2266, 1
      %v2268 = vadd.f32 %v2266, %v2267
      %v2269 = vadd.f32 %v1768, %v2268
      %v2271 = vshrl.u32 %v231, 16
      %v2273 = vrot.slane %v2271, 4
      %v2274 = vshll.u32 %v231, 16
      %v2276 = vrot.slane %v2274, 5
      %v2277 = vor.u32 %v2273, %v2276
      %v2278 = vrot.slane %v2277, 4
      %v2280 = vshll.u32 %v232, 16
      %v2282 = vrot.slane %v2280, 5
      %v2283 = vsel %vm825, %v2278, %v2282
      %v2284 = vshrl.u32 %v232, 16
      %v2286 = vrot.slane %v2284, 4
      %v2287 = vor.u32 %v2286, %v2282
      %v2288 = vrot.slane %v2287, 4
      %v2290 = vshll.u32 %v233, 16
      %v2292 = vrot.slane %v2290, 5
      %v2293 = vsel %vm825, %v2288, %v2292
      %s2294 = scalar_lea.vmem %s1, 192
      %v2295 = vld [vmem:[%s2294] sm:$0xf]
      %v2296 = vld [vmem:[%s2294 + $0x4] sm:$0xf]
      %v2297 = vld [vmem:[%s2294 + $0x8] sm:$0xf]
      %v2298 = vld [vmem:[%s2294 + $0xc] sm:$0xf]
      %v2299 = vld [vmem:[%s2294 + $0x10] sm:$0xf]
      %v2300 = vld [vmem:[%s2294 + $0x14] sm:$0xf]
      %v2301 = vld [vmem:[%s2294 + $0x18] sm:$0xf]
      %v2302 = vld [vmem:[%s2294 + $0x1c] sm:$0xf]
      %v2303 = vld [vmem:[%s2294 + $0x20] sm:$0xf]
      %v2304 = vld [vmem:[%s2294 + $0x24] sm:$0xf]
      %v2305 = vld [vmem:[%s2294 + $0x28] sm:$0xf]
      %v2306 = vld [vmem:[%s2294 + $0x2c] sm:$0xf]
      %v2307 = vld [vmem:[%s2294 + $0x30] sm:$0xf]
      %v2308 = vld [vmem:[%s2294 + $0x34] sm:$0xf]
      %v2309 = vld [vmem:[%s2294 + $0x38] sm:$0xf]
      %v2310 = vld [vmem:[%s2294 + $0x3c] sm:$0xf]
      %v2311 = vunpack.c.l.b16 %v2283
      %v2312 = vunpack.c.l.b16 %v2293
      %v2313 = vpack.c.b16 %v2312, %v2311
      %v2331 = vunpack.c.l.b16 %v2295
      %v2332 = vunpack.c.l.b16 %v2296
      %v2333 = vunpack.c.l.b16 %v2297
      %v2334 = vunpack.c.l.b16 %v2298
      %v2335 = vunpack.c.l.b16 %v2299
      %v2336 = vunpack.c.l.b16 %v2300
      %v2337 = vunpack.c.l.b16 %v2301
      %v2338 = vunpack.c.l.b16 %v2302
      %v2339 = vunpack.c.l.b16 %v2303
      %v2340 = vunpack.c.l.b16 %v2304
      %v2341 = vunpack.c.l.b16 %v2305
      %v2342 = vunpack.c.l.b16 %v2306
      %v2343 = vunpack.c.l.b16 %v2307
      %v2344 = vunpack.c.l.b16 %v2308
      %v2345 = vunpack.c.l.b16 %v2309
      %v2346 = vunpack.c.l.b16 %v2310
      %v2347 = vpack.c.b16 %v2332, %v2331
      %v2348 = vpack.c.b16 %v2334, %v2333
      %v2349 = vpack.c.b16 %v2336, %v2335
      %v2350 = vpack.c.b16 %v2338, %v2337
      %v2351 = vpack.c.b16 %v2340, %v2339
      %v2352 = vpack.c.b16 %v2342, %v2341
      %v2353 = vpack.c.b16 %v2344, %v2343
      %v2354 = vpack.c.b16 %v2346, %v2345
      %2363 = vmatprep.subr.bf16.mxu0 0
      %2364 = vmatpush1.bf16.msra.mxu0 %v2354
      %2365 = vmatprep.subr.bf16.mxu0 0
      %2366 = vmatpush1.bf16.msra.mxu0 %v2353
      %2367 = vmatprep.subr.bf16.mxu0 0
      %2368 = vmatpush1.bf16.msra.mxu0 %v2352
      %2369 = vmatprep.subr.bf16.mxu0 0
      %2370 = vmatpush1.bf16.msra.mxu0 %v2351
      %2371 = vmatprep.subr.bf16.mxu0 0
      %2372 = vmatpush1.bf16.msra.mxu0 %v2350
      %2373 = vmatprep.subr.bf16.mxu0 0
      %2374 = vmatpush1.bf16.msra.mxu0 %v2349
      %2375 = vmatprep.subr.bf16.mxu0 0
      %2376 = vmatpush1.bf16.msra.mxu0 %v2348
      %2377 = vmatprep.subr.bf16.mxu0 0
      %2378 = vmatpush1.bf16.msra.mxu0 %v2347
      %2379 = vmatprep.subr.bf16.mxu0 0
      %2380 = vmatpush2.bf16.msra.mxu0 0
      %2381 = vmatprep.subr.bf16.mxu0 0
      %2382 = vmatpush2.bf16.msra.mxu0 0
      %2383 = vmatprep.subr.bf16.mxu0 0
      %2384 = vmatpush2.bf16.msra.mxu0 0
      %2385 = vmatprep.subr.bf16.mxu0 0
      %2386 = vmatpush2.bf16.msra.mxu0 0
      %2387 = vmatprep.subr.bf16.mxu0 0
      %2388 = vmatpush2.bf16.msra.mxu0 0
      %2389 = vmatprep.subr.bf16.mxu0 0
      %2390 = vmatpush2.bf16.msra.mxu0 0
      %2391 = vmatprep.subr.bf16.mxu0 0
      %2392 = vmatpush2.bf16.msra.mxu0 0
      %2393 = vmatprep.subr.bf16.mxu0 0
      %2394 = vmatpush2.bf16.msra.mxu0 0
      %2395 = vmatprep.mubr.bf16.mxu0 0
      %2396 = vmatmul.mubr.bf16.gmra.mxu0 %v1260
      %v2397 = vpop.f32.mrf.mxu0
      %v2398 = vadd.f32 0.0, %v2397
      %v2399 = vpop.f32.mrf.mxu0
      %v2400 = vpop.f32.mrf.mxu0
      %v2401 = vadd.f32 0.0, %v2400
      %v2402 = vpop.f32.mrf.mxu0
      %2403 = vmatprep.mubr.bf16.mxu0 0
      %2404 = vmatmul.mubr.bf16.gmra.mxu0 %v1261
      %v2405 = vpop.f32.mrf.mxu0
      %v2406 = vadd.f32 0.0, %v2405
      %v2407 = vpop.f32.mrf.mxu0
      %v2408 = vpop.f32.mrf.mxu0
      %v2409 = vadd.f32 0.0, %v2408
      %v2410 = vpop.f32.mrf.mxu0
      %2411 = vmatprep.mubr.bf16.mxu0 0
      %2412 = vmatmul.mubr.bf16.gmra.mxu0 %v1262
      %v2413 = vpop.f32.mrf.mxu0
      %v2414 = vadd.f32 0.0, %v2413
      %v2415 = vpop.f32.mrf.mxu0
      %v2416 = vpop.f32.mrf.mxu0
      %v2417 = vadd.f32 0.0, %v2416
      %v2418 = vpop.f32.mrf.mxu0
      %2419 = vmatprep.mubr.bf16.mxu0 0
      %2420 = vmatmul.mubr.bf16.gmra.mxu0 %v1263
      %v2421 = vpop.f32.mrf.mxu0
      %v2422 = vadd.f32 0.0, %v2421
      %v2423 = vpop.f32.mrf.mxu0
      %v2424 = vpop.f32.mrf.mxu0
      %v2425 = vadd.f32 0.0, %v2424
      %v2426 = vpop.f32.mrf.mxu0
      %2427 = vmatprep.mubr.bf16.mxu0 0
      %2428 = vmatmul.mubr.bf16.gmra.mxu0 %v1264
      %v2429 = vpop.f32.mrf.mxu0
      %v2430 = vadd.f32 0.0, %v2429
      %v2431 = vpop.f32.mrf.mxu0
      %v2432 = vpop.f32.mrf.mxu0
      %v2433 = vadd.f32 0.0, %v2432
      %v2434 = vpop.f32.mrf.mxu0
      %2435 = vmatprep.mubr.bf16.mxu0 0
      %2436 = vmatmul.mubr.bf16.gmra.mxu0 %v1265
      %v2437 = vpop.f32.mrf.mxu0
      %v2438 = vadd.f32 0.0, %v2437
      %v2439 = vpop.f32.mrf.mxu0
      %v2440 = vpop.f32.mrf.mxu0
      %v2441 = vadd.f32 0.0, %v2440
      %v2442 = vpop.f32.mrf.mxu0
      %2443 = vmatprep.mubr.bf16.mxu0 0
      %2444 = vmatmul.mubr.bf16.gmra.mxu0 %v1266
      %v2445 = vpop.f32.mrf.mxu0
      %v2446 = vadd.f32 0.0, %v2445
      %v2447 = vpop.f32.mrf.mxu0
      %v2448 = vpop.f32.mrf.mxu0
      %v2449 = vadd.f32 0.0, %v2448
      %v2450 = vpop.f32.mrf.mxu0
      %2451 = vmatprep.mubr.bf16.mxu0 0
      %2452 = vmatmul.mubr.bf16.gmra.mxu0 %v1267
      %v2453 = vpop.f32.mrf.mxu0
      %v2454 = vadd.f32 0.0, %v2453
      %v2455 = vpop.f32.mrf.mxu0
      %v2456 = vpop.f32.mrf.mxu0
      %v2457 = vadd.f32 0.0, %v2456
      %v2458 = vpop.f32.mrf.mxu0
      %2459 = vmatprep.mubr.bf16.mxu0 0
      %2460 = vmatmul.mubr.bf16.gmra.mxu0 %v1268
      %v2461 = vpop.f32.mrf.mxu0
      %v2462 = vadd.f32 0.0, %v2461
      %v2463 = vpop.f32.mrf.mxu0
      %v2464 = vpop.f32.mrf.mxu0
      %v2465 = vadd.f32 0.0, %v2464
      %v2466 = vpop.f32.mrf.mxu0
      %2467 = vmatprep.mubr.bf16.mxu0 0
      %2468 = vmatmul.mubr.bf16.gmra.mxu0 %v1269
      %v2469 = vpop.f32.mrf.mxu0
      %v2470 = vadd.f32 0.0, %v2469
      %v2471 = vpop.f32.mrf.mxu0
      %v2472 = vpop.f32.mrf.mxu0
      %v2473 = vadd.f32 0.0, %v2472
      %v2474 = vpop.f32.mrf.mxu0
      %2475 = vmatprep.mubr.bf16.mxu0 0
      %2476 = vmatmul.mubr.bf16.gmra.mxu0 %v1270
      %v2477 = vpop.f32.mrf.mxu0
      %v2478 = vadd.f32 0.0, %v2477
      %v2479 = vpop.f32.mrf.mxu0
      %v2480 = vpop.f32.mrf.mxu0
      %v2481 = vadd.f32 0.0, %v2480
      %v2482 = vpop.f32.mrf.mxu0
      %2483 = vmatprep.mubr.bf16.mxu0 0
      %2484 = vmatmul.mubr.bf16.gmra.mxu0 %v1271
      %v2485 = vpop.f32.mrf.mxu0
      %v2486 = vadd.f32 0.0, %v2485
      %v2487 = vpop.f32.mrf.mxu0
      %v2488 = vpop.f32.mrf.mxu0
      %v2489 = vadd.f32 0.0, %v2488
      %v2490 = vpop.f32.mrf.mxu0
      %2491 = vmatprep.mubr.bf16.mxu0 0
      %2492 = vmatmul.mubr.bf16.gmra.mxu0 %v1272
      %v2493 = vpop.f32.mrf.mxu0
      %v2494 = vadd.f32 0.0, %v2493
      %v2495 = vpop.f32.mrf.mxu0
      %v2496 = vpop.f32.mrf.mxu0
      %v2497 = vadd.f32 0.0, %v2496
      %v2498 = vpop.f32.mrf.mxu0
      %2499 = vmatprep.mubr.bf16.mxu0 0
      %2500 = vmatmul.mubr.bf16.gmra.mxu0 %v1273
      %v2501 = vpop.f32.mrf.mxu0
      %v2502 = vadd.f32 0.0, %v2501
      %v2503 = vpop.f32.mrf.mxu0
      %v2504 = vpop.f32.mrf.mxu0
      %v2505 = vadd.f32 0.0, %v2504
      %v2506 = vpop.f32.mrf.mxu0
      %2507 = vmatprep.mubr.bf16.mxu0 0
      %2508 = vmatmul.mubr.bf16.gmra.mxu0 %v1274
      %v2509 = vpop.f32.mrf.mxu0
      %v2510 = vadd.f32 0.0, %v2509
      %v2511 = vpop.f32.mrf.mxu0
      %v2512 = vpop.f32.mrf.mxu0
      %v2513 = vadd.f32 0.0, %v2512
      %v2514 = vpop.f32.mrf.mxu0
      %2515 = vmatprep.mubr.bf16.mxu0 0
      %2516 = vmatmul.mubr.bf16.gmra.mxu0 %v2313
      %v2517 = vpop.f32.mrf.mxu0
      %v2518 = vadd.f32 0.0, %v2517
      %v2519 = vpop.f32.mrf.mxu0
      %v2520 = vpop.f32.mrf.mxu0
      %v2521 = vadd.f32 0.0, %v2520
      %v2522 = vpop.f32.mrf.mxu0
      %2523 = vdwg.mxu0
      %v2524 = vpack.c.bf16 %v2401, %v2398
      %v2525 = vpack.c.bf16 %v2409, %v2406
      %v2526 = vpack.c.bf16 %v2417, %v2414
      %v2527 = vpack.c.bf16 %v2425, %v2422
      %v2528 = vpack.c.bf16 %v2433, %v2430
      %v2529 = vpack.c.bf16 %v2441, %v2438
      %v2530 = vpack.c.bf16 %v2449, %v2446
      %v2531 = vpack.c.bf16 %v2457, %v2454
      %v2532 = vpack.c.bf16 %v2465, %v2462
      %v2533 = vpack.c.bf16 %v2473, %v2470
      %v2534 = vpack.c.bf16 %v2481, %v2478
      %v2535 = vpack.c.bf16 %v2489, %v2486
      %v2536 = vpack.c.bf16 %v2497, %v2494
      %v2537 = vpack.c.bf16 %v2505, %v2502
      %v2538 = vpack.c.bf16 %v2513, %v2510
      %v2539 = vpack.c.bf16 %v2521, %v2518
      %v2556 = vunpack.c.l.b16 %v2524
      %v2557 = vunpack.c.h.b16 %v2524
      %v2558 = vunpack.c.l.b16 %v2525
      %v2559 = vunpack.c.h.b16 %v2525
      %v2560 = vunpack.c.l.b16 %v2526
      %v2561 = vunpack.c.h.b16 %v2526
      %v2562 = vunpack.c.l.b16 %v2527
      %v2563 = vunpack.c.h.b16 %v2527
      %v2564 = vunpack.c.l.b16 %v2528
      %v2565 = vunpack.c.h.b16 %v2528
      %v2566 = vunpack.c.l.b16 %v2529
      %v2567 = vunpack.c.h.b16 %v2529
      %v2568 = vunpack.c.l.b16 %v2530
      %v2569 = vunpack.c.h.b16 %v2530
      %v2570 = vunpack.c.l.b16 %v2531
      %v2571 = vunpack.c.h.b16 %v2531
      %v2572 = vunpack.c.l.b16 %v2532
      %v2573 = vunpack.c.h.b16 %v2532
      %v2574 = vunpack.c.l.b16 %v2533
      %v2575 = vunpack.c.h.b16 %v2533
      %v2576 = vunpack.c.l.b16 %v2534
      %v2577 = vunpack.c.h.b16 %v2534
      %v2578 = vunpack.c.l.b16 %v2535
      %v2579 = vunpack.c.h.b16 %v2535
      %v2580 = vunpack.c.l.b16 %v2536
      %v2581 = vunpack.c.h.b16 %v2536
      %v2582 = vunpack.c.l.b16 %v2537
      %v2583 = vunpack.c.h.b16 %v2537
      %v2584 = vunpack.c.l.b16 %v2538
      %v2585 = vunpack.c.h.b16 %v2538
      %v2586 = vunpack.c.l.b16 %v2539
      %v2587 = vunpack.c.h.b16 %v2539
      %v2588 = vpack.c.b16 %v2556, %v2556
      %v2589 = vpack.c.b16 %v2557, %v2557
      %v2590 = vpack.c.b16 %v2558, %v2558
      %v2591 = vpack.c.b16 %v2559, %v2559
      %v2592 = vpack.c.b16 %v2560, %v2560
      %v2593 = vpack.c.b16 %v2561, %v2561
      %v2594 = vpack.c.b16 %v2562, %v2562
      %v2595 = vpack.c.b16 %v2563, %v2563
      %v2596 = vpack.c.b16 %v2564, %v2564
      %v2597 = vpack.c.b16 %v2565, %v2565
      %v2598 = vpack.c.b16 %v2566, %v2566
      %v2599 = vpack.c.b16 %v2567, %v2567
      %v2600 = vpack.c.b16 %v2568, %v2568
      %v2601 = vpack.c.b16 %v2569, %v2569
      %v2602 = vpack.c.b16 %v2570, %v2570
      %v2603 = vpack.c.b16 %v2571, %v2571
      %v2604 = vpack.c.b16 %v2572, %v2572
      %v2605 = vpack.c.b16 %v2573, %v2573
      %v2606 = vpack.c.b16 %v2574, %v2574
      %v2607 = vpack.c.b16 %v2575, %v2575
      %v2608 = vpack.c.b16 %v2576, %v2576
      %v2609 = vpack.c.b16 %v2577, %v2577
      %v2610 = vpack.c.b16 %v2578, %v2578
      %v2611 = vpack.c.b16 %v2579, %v2579
      %v2612 = vpack.c.b16 %v2580, %v2580
      %v2613 = vpack.c.b16 %v2581, %v2581
      %v2614 = vpack.c.b16 %v2582, %v2582
      %v2615 = vpack.c.b16 %v2583, %v2583
      %v2616 = vpack.c.b16 %v2584, %v2584
      %v2617 = vpack.c.b16 %v2585, %v2585
      %v2618 = vpack.c.b16 %v2586, %v2586
      %v2619 = vpack.c.b16 %v2587, %v2587
      %s2652 = scalar_lea.vmem %s177, 384
      %2653 = vst [vmem:[%s2652] sm:$0xf] %v2588
      %2654 = vst [vmem:[%s2652 + $0x4] sm:$0xf] %v2589
      %2655 = vst [vmem:[%s2652 + $0x8] sm:$0xf] %v2590
      %2656 = vst [vmem:[%s2652 + $0xc] sm:$0xf] %v2591
      %2657 = vst [vmem:[%s2652 + $0x10] sm:$0xf] %v2592
      %2658 = vst [vmem:[%s2652 + $0x14] sm:$0xf] %v2593
      %2659 = vst [vmem:[%s2652 + $0x18] sm:$0xf] %v2594
      %2660 = vst [vmem:[%s2652 + $0x1c] sm:$0xf] %v2595
      %2661 = vst [vmem:[%s2652 + $0x20] sm:$0xf] %v2596
      %2662 = vst [vmem:[%s2652 + $0x24] sm:$0xf] %v2597
      %2663 = vst [vmem:[%s2652 + $0x28] sm:$0xf] %v2598
      %2664 = vst [vmem:[%s2652 + $0x2c] sm:$0xf] %v2599
      %2665 = vst [vmem:[%s2652 + $0x30] sm:$0xf] %v2600
      %2666 = vst [vmem:[%s2652 + $0x34] sm:$0xf] %v2601
      %2667 = vst [vmem:[%s2652 + $0x38] sm:$0xf] %v2602
      %2668 = vst [vmem:[%s2652 + $0x3c] sm:$0xf] %v2603
      %2669 = vst [vmem:[%s2652 + $0x40] sm:$0xf] %v2604
      %2670 = vst [vmem:[%s2652 + $0x44] sm:$0xf] %v2605
      %2671 = vst [vmem:[%s2652 + $0x48] sm:$0xf] %v2606
      %2672 = vst [vmem:[%s2652 + $0x4c] sm:$0xf] %v2607
      %2673 = vst [vmem:[%s2652 + $0x50] sm:$0xf] %v2608
      %2674 = vst [vmem:[%s2652 + $0x54] sm:$0xf] %v2609
      %2675 = vst [vmem:[%s2652 + $0x58] sm:$0xf] %v2610
      %2676 = vst [vmem:[%s2652 + $0x5c] sm:$0xf] %v2611
      %2677 = vst [vmem:[%s2652 + $0x60] sm:$0xf] %v2612
      %2678 = vst [vmem:[%s2652 + $0x64] sm:$0xf] %v2613
      %2679 = vst [vmem:[%s2652 + $0x68] sm:$0xf] %v2614
      %2680 = vst [vmem:[%s2652 + $0x6c] sm:$0xf] %v2615
      %2681 = vst [vmem:[%s2652 + $0x70] sm:$0xf] %v2616
      %2682 = vst [vmem:[%s2652 + $0x74] sm:$0xf] %v2617
      %2683 = vst [vmem:[%s2652 + $0x78] sm:$0xf] %v2618
      %2684 = vst [vmem:[%s2652 + $0x7c] sm:$0xf] %v2619
      %v2685 = vadd.f32 %v2398, %v2401
      %v2686 = vadd.f32 %v2685, %v2406
      %v2687 = vadd.f32 %v2686, %v2409
      %v2688 = vadd.f32 %v2687, %v2414
      %v2689 = vadd.f32 %v2688, %v2417
      %v2690 = vadd.f32 %v2689, %v2422
      %v2691 = vadd.f32 %v2690, %v2425
      %v2692 = vadd.f32 %v2691, %v2430
      %v2693 = vadd.f32 %v2692, %v2433
      %v2694 = vadd.f32 %v2693, %v2438
      %v2695 = vadd.f32 %v2694, %v2441
      %v2696 = vadd.f32 %v2695, %v2446
      %v2697 = vadd.f32 %v2696, %v2449
      %v2698 = vadd.f32 %v2697, %v2454
      %v2699 = vadd.f32 %v2698, %v2457
      %v2700 = vadd.f32 %v2699, %v2462
      %v2701 = vadd.f32 %v2700, %v2465
      %v2702 = vadd.f32 %v2701, %v2470
      %v2703 = vadd.f32 %v2702, %v2473
      %v2704 = vadd.f32 %v2703, %v2478
      %v2705 = vadd.f32 %v2704, %v2481
      %v2706 = vadd.f32 %v2705, %v2486
      %v2707 = vadd.f32 %v2706, %v2489
      %v2708 = vadd.f32 %v2707, %v2494
      %v2709 = vadd.f32 %v2708, %v2497
      %v2710 = vadd.f32 %v2709, %v2502
      %v2711 = vadd.f32 %v2710, %v2505
      %v2712 = vadd.f32 %v2711, %v2510
      %v2713 = vadd.f32 %v2712, %v2513
      %v2714 = vadd.f32 %v2713, %v2518
      %v2715 = vadd.f32 %v2714, %v2521
      %v2716 = vrot.slane %v2715, 4
      %v2717 = vadd.f32 %v2715, %v2716
      %v2718 = vrot.slane %v2717, 2
      %v2719 = vadd.f32 %v2717, %v2718
      %v2720 = vrot.slane %v2719, 1
      %v2721 = vadd.f32 %v2719, %v2720
      %v2722 = vadd.f32 %v2199, %v2721
      %v2723 = vmul.f32 %v2398, %v2398
      %v2724 = vmul.f32 %v2401, %v2401
      %v2725 = vmul.f32 %v2406, %v2406
      %v2726 = vmul.f32 %v2409, %v2409
      %v2727 = vmul.f32 %v2414, %v2414
      %v2728 = vmul.f32 %v2417, %v2417
      %v2729 = vmul.f32 %v2422, %v2422
      %v2730 = vmul.f32 %v2425, %v2425
      %v2731 = vmul.f32 %v2430, %v2430
      %v2732 = vmul.f32 %v2433, %v2433
      %v2733 = vmul.f32 %v2438, %v2438
      %v2734 = vmul.f32 %v2441, %v2441
      %v2735 = vmul.f32 %v2446, %v2446
      %v2736 = vmul.f32 %v2449, %v2449
      %v2737 = vmul.f32 %v2454, %v2454
      %v2738 = vmul.f32 %v2457, %v2457
      %v2739 = vmul.f32 %v2462, %v2462
      %v2740 = vmul.f32 %v2465, %v2465
      %v2741 = vmul.f32 %v2470, %v2470
      %v2742 = vmul.f32 %v2473, %v2473
      %v2743 = vmul.f32 %v2478, %v2478
      %v2744 = vmul.f32 %v2481, %v2481
      %v2745 = vmul.f32 %v2486, %v2486
      %v2746 = vmul.f32 %v2489, %v2489
      %v2747 = vmul.f32 %v2494, %v2494
      %v2748 = vmul.f32 %v2497, %v2497
      %v2749 = vmul.f32 %v2502, %v2502
      %v2750 = vmul.f32 %v2505, %v2505
      %v2751 = vmul.f32 %v2510, %v2510
      %v2752 = vmul.f32 %v2513, %v2513
      %v2753 = vmul.f32 %v2518, %v2518
      %v2754 = vmul.f32 %v2521, %v2521
      %v2755 = vadd.f32 %v2723, %v2724
      %v2756 = vadd.f32 %v2755, %v2725
      %v2757 = vadd.f32 %v2756, %v2726
      %v2758 = vadd.f32 %v2757, %v2727
      %v2759 = vadd.f32 %v2758, %v2728
      %v2760 = vadd.f32 %v2759, %v2729
      %v2761 = vadd.f32 %v2760, %v2730
      %v2762 = vadd.f32 %v2761, %v2731
      %v2763 = vadd.f32 %v2762, %v2732
      %v2764 = vadd.f32 %v2763, %v2733
      %v2765 = vadd.f32 %v2764, %v2734
      %v2766 = vadd.f32 %v2765, %v2735
      %v2767 = vadd.f32 %v2766, %v2736
      %v2768 = vadd.f32 %v2767, %v2737
      %v2769 = vadd.f32 %v2768, %v2738
      %v2770 = vadd.f32 %v2769, %v2739
      %v2771 = vadd.f32 %v2770, %v2740
      %v2772 = vadd.f32 %v2771, %v2741
      %v2773 = vadd.f32 %v2772, %v2742
      %v2774 = vadd.f32 %v2773, %v2743
      %v2775 = vadd.f32 %v2774, %v2744
      %v2776 = vadd.f32 %v2775, %v2745
      %v2777 = vadd.f32 %v2776, %v2746
      %v2778 = vadd.f32 %v2777, %v2747
      %v2779 = vadd.f32 %v2778, %v2748
      %v2780 = vadd.f32 %v2779, %v2749
      %v2781 = vadd.f32 %v2780, %v2750
      %v2782 = vadd.f32 %v2781, %v2751
      %v2783 = vadd.f32 %v2782, %v2752
      %v2784 = vadd.f32 %v2783, %v2753
      %v2785 = vadd.f32 %v2784, %v2754
      %v2786 = vrot.slane %v2785, 4
      %v2787 = vadd.f32 %v2785, %v2786
      %v2788 = vrot.slane %v2787, 2
      %v2789 = vadd.f32 %v2787, %v2788
      %v2790 = vrot.slane %v2789, 1
      %v2791 = vadd.f32 %v2789, %v2790
      %v2792 = vadd.f32 %v2269, %v2791
      %vm2793 = vcmask 1040384
      %v2794 = vsel %vm2793, %v2722, %v2792
      %2795 = vst [vmem:[%s181] sm:$0x3] %v2794
      %p2796 = scmp.lt.s32.totalorder %s15, 1
      %s2797 = scalar_select %p2796, %s15, 1
      %s2798 = smul.addr %s2797, 128
      %s2799 = smul.addr %s2798, 4
      %s2800 = scalar_lea.vmem %s2, %s2799
      %p2801 = scmp.lt.s32.totalorder %s15, 1
      %s2802 = scalar_select %p2801, %s15, 1
      %s2803 = smul.addr %s2802, 2
      %s2804 = scalar_lea.vmem %s3, %s2803
      // Predicated region
      $region29: #{upsample2x_block.1} parent=27 // pred_check
        %p2805 = pneg %p80
      $region30: #{upsample2x_block.1} parent=27 // pred_check_branch
        %2807 = sbr.rel (%p2805) target = $region32
      $region31: #{upsample2x_block.1} parent=27 // pred_region
        _
      $region32: #{upsample2x_block.1} parent=27 // pred_fallthru
        _
      // Predicated region
      $region33: #{upsample2x_block.1} parent=27 // pred_check
        %p2808 = pneg %p106
      $region34: #{upsample2x_block.1} parent=27 // pred_check_branch
        %2810 = sbr.rel (%p2808) target = $region36
      $region35: #{upsample2x_block.1} parent=27 // pred_region
        _
      $region36: #{upsample2x_block.1} parent=27 // pred_fallthru
        _
    $region28: #{upsample2x_block.1} parent=5 // pred_fallthru
      _
    %p2811 = scmp.le.s32.totalorder 2, %s10
    // Predicated region
    $region37: #{upsample2x_block.1} parent=5 // pred_check
      %p2812 = pneg %p2811
    $region38: #{upsample2x_block.1} parent=5 // pred_check_branch
      %2814 = sbr.rel (%p2812) target = $region40
    $region39: #{upsample2x_block.1} parent=5 // pred_region
      %s2815 = ssub.s32 %s10, 2
      // Predicated region
      $region41: #{upsample2x_block.1} parent=39 // pred_check
        %p2816 = pneg %p86
      $region42: #{upsample2x_block.1} parent=39 // pred_check_branch
        %2818 = sbr.rel (%p2816) target = $region44
      $region43: #{upsample2x_block.1} parent=39 // pred_region
        %p2819 = scmp.lt.s32.totalorder %s16, 1
        %s2820 = scalar_select %p2819, %s16, 1
        %s2821 = smul.addr %s2820, 128
        %s2822 = smul.addr %s2821, 4
        %s2823 = scalar_lea.vmem %s2, %s2822
      $region44: #{upsample2x_block.1} parent=39 // pred_fallthru
        _
      // Predicated region
      $region45: #{upsample2x_block.1} parent=39 // pred_check
        %p2824 = pneg %p112
      $region46: #{upsample2x_block.1} parent=39 // pred_check_branch
        %2826 = sbr.rel (%p2824) target = $region48
      $region47: #{upsample2x_block.1} parent=39 // pred_region
        %p2827 = scmp.lt.s32.totalorder %s16, 1
        %s2828 = scalar_select %p2827, %s16, 1
        %s2829 = smul.addr %s2828, 2
        %s2830 = scalar_lea.vmem %s3, %s2829
      $region48: #{upsample2x_block.1} parent=39 // pred_fallthru
        _
    $region40: #{upsample2x_block.1} parent=5 // pred_fallthru
      _
  $region6: #{upsample2x_block.1} parent=0 // loop_footer
    %s14 = sadd.s32 1, %s10
  $region7: #{upsample2x_block.1} parent=0 // loop_footer_branch
    %9 = sbr.rel target = $region3
  $region8: #{upsample2x_block.1} parent=0 // loop_exit
    _

</llo_original>
